<compile_context>
chip_gen: v7x
topology: tpu7x:2x2x1
jax: 0.10.0
libtpu: 0.0.40
codegen_flags: <defaults>
</compile_context>

<pallas_src>
import jax
import jax.numpy as jnp
from jax.experimental import pallas as pl
from jax.experimental.pallas import tpu as pltpu

HIDDEN_SIZE = 64
INPUT_SIZE = 1
OUTPUT_SIZE = 1


def _lstm_kernel(x_ref, wih_ref, bias_ref, whh_ref, fcw_ref, fcb_ref, out_ref):
    # x_ref:   (T, B, 1)  time-major input
    # wih_ref: (1, 4H)    W_ih^T (input_size == 1 -> a single row)
    # bias_ref:(1, 4H)    b_ih + b_hh folded
    # whh_ref: (H, 4H)    W_hh^T
    # fcw_ref: (1, H)     fc weight row
    # fcb_ref: (1, 1)     fc bias
    T, B, _ = x_ref.shape
    H = whh_ref.shape[0]

    wih = wih_ref[...]       # (1, 4H) — tiny, loop-invariant
    bias = bias_ref[...]     # (1, 4H)

    h = jnp.zeros((B, H), jnp.float32)   # vreg-carried recurrent state
    c = jnp.zeros((B, H), jnp.float32)

    # Fully-unrolled time recurrence (T is small and static).
    for t in range(T):
        x_t = x_ref[t]                                     # (B, 1)
        # Fused input projection (I == 1): x @ W_ih^T == x_t * w_ih_row.  Hidden under the
        # recurrent matmul — 2 VPU ops per step.
        gates = (x_t * wih + bias
                 + jnp.dot(h, whh_ref[...], preferred_element_type=jnp.float32))  # (B, 4H)
        sig = jax.nn.sigmoid(gates)                        # full-width sigmoid (i, f, -, o)
        tnh = jnp.tanh(gates[:, 2 * H:4 * H])              # lane-aligned half (2H == 128)
        i_g = sig[:, 0 * H:1 * H]                          # PyTorch gate order: i, f, g, o
        f_g = sig[:, 1 * H:2 * H]
        g_g = tnh[:, 0:H]
        o_g = sig[:, 3 * H:4 * H]
        c = f_g * c + i_g * g_g
        h = o_g * jnp.tanh(c)

    # fc on the final hidden state h_n[-1]: N == 1 -> VPU multiply + lane reduction, not MXU.
    out = jnp.sum(h * fcw_ref[...], axis=-1, keepdims=True) + fcb_ref[...]   # (B, 1)
    out_ref[...] = out.astype(out_ref.dtype)


@jax.jit
def lstm_model_forward(x, params):
    """x: (B, T, I) float32, batch_first like nn.LSTM(batch_first=True)."""
    w_ih, w_hh, b_ih, b_hh, fc_w, fc_b = params
    B, T, I = x.shape
    H = w_hh.shape[1]            # (4H, H) -> H
    O = fc_w.shape[0]

    # Only trivial, loop-invariant reshapes/transposes remain in the wrapper (all jitted into
    # one executable with the pallas_call):
    x_tm = jnp.transpose(x, (1, 0, 2))                 # (T, B, 1) time-major, 384 B
    wih_row = w_ih.reshape(1, 4 * H)                   # (1, 4H)   (I == 1 -> column == row)
    bias = (b_ih + b_hh).reshape(1, 4 * H)             # (1, 4H)
    w_hh_t = jnp.transpose(w_hh)                       # (H, 4H)
    fc_w_row = fc_w.reshape(1, H)                      # (1, H)
    fc_b2 = fc_b.reshape(1, 1)                         # (1, 1)

    vmem = lambda: pl.BlockSpec(memory_space=pltpu.MemorySpace.VMEM)
    return pl.pallas_call(
        _lstm_kernel,
        out_shape=jax.ShapeDtypeStruct((B, O), jnp.float32),
        in_specs=[vmem(), vmem(), vmem(), vmem(), vmem(), vmem()],  # whole arrays in VMEM, no grid
        out_specs=vmem(),
    )(x_tm, wih_row, bias, w_hh_t, fc_w_row, fc_b2)


def init_params(key, input_size, hidden_size, output_size):
    # PyTorch nn.LSTM / nn.Linear default: U(-1/sqrt(hidden), 1/sqrt(hidden)).
    ks = jax.random.split(key, 6)
    k_lstm = 1.0 / jnp.sqrt(hidden_size)
    k_fc = 1.0 / jnp.sqrt(hidden_size)
    w_ih = jax.random.uniform(ks[0], (4 * hidden_size, input_size),
                              minval=-k_lstm, maxval=k_lstm, dtype=jnp.float32)
    w_hh = jax.random.uniform(ks[1], (4 * hidden_size, hidden_size),
                              minval=-k_lstm, maxval=k_lstm, dtype=jnp.float32)
    b_ih = jax.random.uniform(ks[2], (4 * hidden_size,),
                              minval=-k_lstm, maxval=k_lstm, dtype=jnp.float32)
    b_hh = jax.random.uniform(ks[3], (4 * hidden_size,),
                              minval=-k_lstm, maxval=k_lstm, dtype=jnp.float32)
    fc_w = jax.random.uniform(ks[4], (output_size, hidden_size),
                              minval=-k_fc, maxval=k_fc, dtype=jnp.float32)
    fc_b = jax.random.uniform(ks[5], (output_size,),
                              minval=-k_fc, maxval=k_fc, dtype=jnp.float32)
    return (w_ih, w_hh, b_ih, b_hh, fc_w, fc_b)


def reference_forward(x, params):
    """Pure-JAX reference matching PyTorch LSTM semantics."""
    w_ih, w_hh, b_ih, b_hh, fc_w, fc_b = params
    B, T, I = x.shape
    H = w_hh.shape[1]

    def step(carry, x_t):
        h, c = carry
        gates = x_t @ w_ih.T + h @ w_hh.T + b_ih + b_hh
        i_g = jax.nn.sigmoid(gates[:, 0 * H:1 * H])
        f_g = jax.nn.sigmoid(gates[:, 1 * H:2 * H])
        g_g = jnp.tanh(gates[:, 2 * H:3 * H])
        o_g = jax.nn.sigmoid(gates[:, 3 * H:4 * H])
        c = f_g * c + i_g * g_g
        h = o_g * jnp.tanh(c)
        return (h, c), None

    h0 = jnp.zeros((B, H), jnp.float32)
    c0 = jnp.zeros((B, H), jnp.float32)
    (h_n, _), _ = jax.lax.scan(step, (h0, c0), jnp.transpose(x, (1, 0, 2)))
    return h_n @ fc_w.T + fc_b


if __name__ == "__main__":
    B, T = 8, 12
    key = jax.random.PRNGKey(0)
    k_x, k_p = jax.random.split(key)
    x = jax.random.normal(k_x, (B, T, INPUT_SIZE), dtype=jnp.float32)
    params = init_params(k_p, INPUT_SIZE, HIDDEN_SIZE, OUTPUT_SIZE)

    out = lstm_model_forward(x, params)
    out = jax.block_until_ready(out)

    ref = reference_forward(x, params)
    assert out.shape == (B, OUTPUT_SIZE)
    assert jnp.allclose(out, ref, atol=1e-5, rtol=1e-5), (out, ref)
    print("KERNEL_OK")
</pallas_src>

<mosaic_0001>
module attributes {stable_mosaic.version = 11 : i64} {
  func.func @_lstm_kernel(%arg0: memref<12x8x1xf32, #tpu.memory_space<vmem>>, %arg1: memref<1x256xf32, #tpu.memory_space<vmem>>, %arg2: memref<1x256xf32, #tpu.memory_space<vmem>>, %arg3: memref<64x256xf32, #tpu.memory_space<vmem>>, %arg4: memref<1x64xf32, #tpu.memory_space<vmem>>, %arg5: memref<1x1xf32, #tpu.memory_space<vmem>>, %arg6: memref<8x1xf32, #tpu.memory_space<vmem>>) attributes {dimension_semantics = [], scalar_prefetch = 0 : i64, scratch_operands = 0 : i64, tpu.core_type = #tpu.core_type<tc>} {
    %c0 = arith.constant 0 : index
    %c0_0 = arith.constant 0 : index
    %0 = vector.load %arg1[%c0, %c0_0] : memref<1x256xf32, #tpu.memory_space<vmem>>, vector<1x256xf32>
    %c0_1 = arith.constant 0 : index
    %c0_2 = arith.constant 0 : index
    %1 = vector.load %arg2[%c0_1, %c0_2] : memref<1x256xf32, #tpu.memory_space<vmem>>, vector<1x256xf32>
    %cst = arith.constant 0.000000e+00 : f32
    %2 = vector.broadcast %cst : f32 to vector<8x64xf32>
    %cst_3 = arith.constant 0.000000e+00 : f32
    %3 = vector.broadcast %cst_3 : f32 to vector<8x64xf32>
    %c0_4 = arith.constant 0 : index
    %c0_5 = arith.constant 0 : index
    %c0_6 = arith.constant 0 : index
    %4 = vector.load %arg0[%c0_4, %c0_5, %c0_6] : memref<12x8x1xf32, #tpu.memory_space<vmem>>, vector<1x8x1xf32>
    %5 = vector.shape_cast %4 : vector<1x8x1xf32> to vector<8x1xf32>
    %6 = vector.broadcast %5 : vector<8x1xf32> to vector<8x256xf32>
    %7 = vector.broadcast %0 : vector<1x256xf32> to vector<8x256xf32>
    %8 = arith.mulf %6, %7 : vector<8x256xf32>
    %9 = vector.broadcast %1 : vector<1x256xf32> to vector<8x256xf32>
    %10 = arith.addf %8, %9 : vector<8x256xf32>
    %c0_7 = arith.constant 0 : index
    %c0_8 = arith.constant 0 : index
    %11 = vector.load %arg3[%c0_7, %c0_8] : memref<64x256xf32, #tpu.memory_space<vmem>>, vector<64x256xf32>
    %cst_9 = arith.constant dense<0.000000e+00> : vector<8x256xf32>
    %12 = tpu.matmul %2, %11, %cst_9 {dimension_numbers = #tpu.dot_dimension_numbers<[1], [0], [0], [1], [0, 0, 1, 1], [], []>} : vector<8x64xf32>, vector<64x256xf32>, vector<8x256xf32> -> vector<8x256xf32>
    %13 = arith.addf %10, %12 : vector<8x256xf32>
    %14 = arith.negf %13 : vector<8x256xf32>
    %15 = math.exp %14 : vector<8x256xf32>
    %cst_10 = arith.constant 1.000000e+00 : f32
    %16 = vector.broadcast %cst_10 : f32 to vector<8x256xf32>
    %17 = arith.addf %16, %15 : vector<8x256xf32>
    %18 = arith.divf %16, %17 : vector<8x256xf32>
    %19 = vector.extract_strided_slice %13 {offsets = [0, 128], sizes = [8, 128], strides = [1, 1]} : vector<8x256xf32> to vector<8x128xf32>
    %20 = math.tanh %19 : vector<8x128xf32>
    %21 = vector.extract_strided_slice %18 {offsets = [0, 0], sizes = [8, 64], strides = [1, 1]} : vector<8x256xf32> to vector<8x64xf32>
    %22 = vector.extract_strided_slice %18 {offsets = [0, 64], sizes = [8, 64], strides = [1, 1]} : vector<8x256xf32> to vector<8x64xf32>
    %23 = vector.extract_strided_slice %20 {offsets = [0, 0], sizes = [8, 64], strides = [1, 1]} : vector<8x128xf32> to vector<8x64xf32>
    %24 = vector.extract_strided_slice %18 {offsets = [0, 192], sizes = [8, 64], strides = [1, 1]} : vector<8x256xf32> to vector<8x64xf32>
    %25 = arith.mulf %22, %3 : vector<8x64xf32>
    %26 = arith.mulf %21, %23 : vector<8x64xf32>
    %27 = arith.addf %25, %26 : vector<8x64xf32>
    %28 = math.tanh %27 : vector<8x64xf32>
    %29 = arith.mulf %24, %28 : vector<8x64xf32>
    %c1 = arith.constant 1 : index
    %c0_11 = arith.constant 0 : index
    %c0_12 = arith.constant 0 : index
    %30 = vector.load %arg0[%c1, %c0_11, %c0_12] : memref<12x8x1xf32, #tpu.memory_space<vmem>>, vector<1x8x1xf32>
    %31 = vector.shape_cast %30 : vector<1x8x1xf32> to vector<8x1xf32>
    %32 = vector.broadcast %31 : vector<8x1xf32> to vector<8x256xf32>
    %33 = vector.broadcast %0 : vector<1x256xf32> to vector<8x256xf32>
    %34 = arith.mulf %32, %33 : vector<8x256xf32>
    %35 = vector.broadcast %1 : vector<1x256xf32> to vector<8x256xf32>
    %36 = arith.addf %34, %35 : vector<8x256xf32>
    %c0_13 = arith.constant 0 : index
    %c0_14 = arith.constant 0 : index
    %37 = vector.load %arg3[%c0_13, %c0_14] : memref<64x256xf32, #tpu.memory_space<vmem>>, vector<64x256xf32>
    %cst_15 = arith.constant dense<0.000000e+00> : vector<8x256xf32>
    %38 = tpu.matmul %29, %37, %cst_15 {dimension_numbers = #tpu.dot_dimension_numbers<[1], [0], [0], [1], [0, 0, 1, 1], [], []>} : vector<8x64xf32>, vector<64x256xf32>, vector<8x256xf32> -> vector<8x256xf32>
    %39 = arith.addf %36, %38 : vector<8x256xf32>
    %40 = arith.negf %39 : vector<8x256xf32>
    %41 = math.exp %40 : vector<8x256xf32>
    %cst_16 = arith.constant 1.000000e+00 : f32
    %42 = vector.broadcast %cst_16 : f32 to vector<8x256xf32>
    %43 = arith.addf %42, %41 : vector<8x256xf32>
    %44 = arith.divf %42, %43 : vector<8x256xf32>
    %45 = vector.extract_strided_slice %39 {offsets = [0, 128], sizes = [8, 128], strides = [1, 1]} : vector<8x256xf32> to vector<8x128xf32>
    %46 = math.tanh %45 : vector<8x128xf32>
    %47 = vector.extract_strided_slice %44 {offsets = [0, 0], sizes = [8, 64], strides = [1, 1]} : vector<8x256xf32> to vector<8x64xf32>
    %48 = vector.extract_strided_slice %44 {offsets = [0, 64], sizes = [8, 64], strides = [1, 1]} : vector<8x256xf32> to vector<8x64xf32>
    %49 = vector.extract_strided_slice %46 {offsets = [0, 0], sizes = [8, 64], strides = [1, 1]} : vector<8x128xf32> to vector<8x64xf32>
    %50 = vector.extract_strided_slice %44 {offsets = [0, 192], sizes = [8, 64], strides = [1, 1]} : vector<8x256xf32> to vector<8x64xf32>
    %51 = arith.mulf %48, %27 : vector<8x64xf32>
    %52 = arith.mulf %47, %49 : vector<8x64xf32>
    %53 = arith.addf %51, %52 : vector<8x64xf32>
    %54 = math.tanh %53 : vector<8x64xf32>
    %55 = arith.mulf %50, %54 : vector<8x64xf32>
    %c2 = arith.constant 2 : index
    %c0_17 = arith.constant 0 : index
    %c0_18 = arith.constant 0 : index
    %56 = vector.load %arg0[%c2, %c0_17, %c0_18] : memref<12x8x1xf32, #tpu.memory_space<vmem>>, vector<1x8x1xf32>
    %57 = vector.shape_cast %56 : vector<1x8x1xf32> to vector<8x1xf32>
    %58 = vector.broadcast %57 : vector<8x1xf32> to vector<8x256xf32>
    %59 = vector.broadcast %0 : vector<1x256xf32> to vector<8x256xf32>
    %60 = arith.mulf %58, %59 : vector<8x256xf32>
    %61 = vector.broadcast %1 : vector<1x256xf32> to vector<8x256xf32>
    %62 = arith.addf %60, %61 : vector<8x256xf32>
    %c0_19 = arith.constant 0 : index
    %c0_20 = arith.constant 0 : index
    %63 = vector.load %arg3[%c0_19, %c0_20] : memref<64x256xf32, #tpu.memory_space<vmem>>, vector<64x256xf32>
    %cst_21 = arith.constant dense<0.000000e+00> : vector<8x256xf32>
    %64 = tpu.matmul %55, %63, %cst_21 {dimension_numbers = #tpu.dot_dimension_numbers<[1], [0], [0], [1], [0, 0, 1, 1], [], []>} : vector<8x64xf32>, vector<64x256xf32>, vector<8x256xf32> -> vector<8x256xf32>
    %65 = arith.addf %62, %64 : vector<8x256xf32>
    %66 = arith.negf %65 : vector<8x256xf32>
    %67 = math.exp %66 : vector<8x256xf32>
    %cst_22 = arith.constant 1.000000e+00 : f32
    %68 = vector.broadcast %cst_22 : f32 to vector<8x256xf32>
    %69 = arith.addf %68, %67 : vector<8x256xf32>
    %70 = arith.divf %68, %69 : vector<8x256xf32>
    %71 = vector.extract_strided_slice %65 {offsets = [0, 128], sizes = [8, 128], strides = [1, 1]} : vector<8x256xf32> to vector<8x128xf32>
    %72 = math.tanh %71 : vector<8x128xf32>
    %73 = vector.extract_strided_slice %70 {offsets = [0, 0], sizes = [8, 64], strides = [1, 1]} : vector<8x256xf32> to vector<8x64xf32>
    %74 = vector.extract_strided_slice %70 {offsets = [0, 64], sizes = [8, 64], strides = [1, 1]} : vector<8x256xf32> to vector<8x64xf32>
    %75 = vector.extract_strided_slice %72 {offsets = [0, 0], sizes = [8, 64], strides = [1, 1]} : vector<8x128xf32> to vector<8x64xf32>
    %76 = vector.extract_strided_slice %70 {offsets = [0, 192], sizes = [8, 64], strides = [1, 1]} : vector<8x256xf32> to vector<8x64xf32>
    %77 = arith.mulf %74, %53 : vector<8x64xf32>
    %78 = arith.mulf %73, %75 : vector<8x64xf32>
    %79 = arith.addf %77, %78 : vector<8x64xf32>
    %80 = math.tanh %79 : vector<8x64xf32>
    %81 = arith.mulf %76, %80 : vector<8x64xf32>
    %c3 = arith.constant 3 : index
    %c0_23 = arith.constant 0 : index
    %c0_24 = arith.constant 0 : index
    %82 = vector.load %arg0[%c3, %c0_23, %c0_24] : memref<12x8x1xf32, #tpu.memory_space<vmem>>, vector<1x8x1xf32>
    %83 = vector.shape_cast %82 : vector<1x8x1xf32> to vector<8x1xf32>
    %84 = vector.broadcast %83 : vector<8x1xf32> to vector<8x256xf32>
    %85 = vector.broadcast %0 : vector<1x256xf32> to vector<8x256xf32>
    %86 = arith.mulf %84, %85 : vector<8x256xf32>
    %87 = vector.broadcast %1 : vector<1x256xf32> to vector<8x256xf32>
    %88 = arith.addf %86, %87 : vector<8x256xf32>
    %c0_25 = arith.constant 0 : index
    %c0_26 = arith.constant 0 : index
    %89 = vector.load %arg3[%c0_25, %c0_26] : memref<64x256xf32, #tpu.memory_space<vmem>>, vector<64x256xf32>
    %cst_27 = arith.constant dense<0.000000e+00> : vector<8x256xf32>
    %90 = tpu.matmul %81, %89, %cst_27 {dimension_numbers = #tpu.dot_dimension_numbers<[1], [0], [0], [1], [0, 0, 1, 1], [], []>} : vector<8x64xf32>, vector<64x256xf32>, vector<8x256xf32> -> vector<8x256xf32>
    %91 = arith.addf %88, %90 : vector<8x256xf32>
    %92 = arith.negf %91 : vector<8x256xf32>
    %93 = math.exp %92 : vector<8x256xf32>
    %cst_28 = arith.constant 1.000000e+00 : f32
    %94 = vector.broadcast %cst_28 : f32 to vector<8x256xf32>
    %95 = arith.addf %94, %93 : vector<8x256xf32>
    %96 = arith.divf %94, %95 : vector<8x256xf32>
    %97 = vector.extract_strided_slice %91 {offsets = [0, 128], sizes = [8, 128], strides = [1, 1]} : vector<8x256xf32> to vector<8x128xf32>
    %98 = math.tanh %97 : vector<8x128xf32>
    %99 = vector.extract_strided_slice %96 {offsets = [0, 0], sizes = [8, 64], strides = [1, 1]} : vector<8x256xf32> to vector<8x64xf32>
    %100 = vector.extract_strided_slice %96 {offsets = [0, 64], sizes = [8, 64], strides = [1, 1]} : vector<8x256xf32> to vector<8x64xf32>
    %101 = vector.extract_strided_slice %98 {offsets = [0, 0], sizes = [8, 64], strides = [1, 1]} : vector<8x128xf32> to vector<8x64xf32>
    %102 = vector.extract_strided_slice %96 {offsets = [0, 192], sizes = [8, 64], strides = [1, 1]} : vector<8x256xf32> to vector<8x64xf32>
    %103 = arith.mulf %100, %79 : vector<8x64xf32>
    %104 = arith.mulf %99, %101 : vector<8x64xf32>
    %105 = arith.addf %103, %104 : vector<8x64xf32>
    %106 = math.tanh %105 : vector<8x64xf32>
    %107 = arith.mulf %102, %106 : vector<8x64xf32>
    %c4 = arith.constant 4 : index
    %c0_29 = arith.constant 0 : index
    %c0_30 = arith.constant 0 : index
    %108 = vector.load %arg0[%c4, %c0_29, %c0_30] : memref<12x8x1xf32, #tpu.memory_space<vmem>>, vector<1x8x1xf32>
    %109 = vector.shape_cast %108 : vector<1x8x1xf32> to vector<8x1xf32>
    %110 = vector.broadcast %109 : vector<8x1xf32> to vector<8x256xf32>
    %111 = vector.broadcast %0 : vector<1x256xf32> to vector<8x256xf32>
    %112 = arith.mulf %110, %111 : vector<8x256xf32>
    %113 = vector.broadcast %1 : vector<1x256xf32> to vector<8x256xf32>
    %114 = arith.addf %112, %113 : vector<8x256xf32>
    %c0_31 = arith.constant 0 : index
    %c0_32 = arith.constant 0 : index
    %115 = vector.load %arg3[%c0_31, %c0_32] : memref<64x256xf32, #tpu.memory_space<vmem>>, vector<64x256xf32>
    %cst_33 = arith.constant dense<0.000000e+00> : vector<8x256xf32>
    %116 = tpu.matmul %107, %115, %cst_33 {dimension_numbers = #tpu.dot_dimension_numbers<[1], [0], [0], [1], [0, 0, 1, 1], [], []>} : vector<8x64xf32>, vector<64x256xf32>, vector<8x256xf32> -> vector<8x256xf32>
    %117 = arith.addf %114, %116 : vector<8x256xf32>
    %118 = arith.negf %117 : vector<8x256xf32>
    %119 = math.exp %118 : vector<8x256xf32>
    %cst_34 = arith.constant 1.000000e+00 : f32
    %120 = vector.broadcast %cst_34 : f32 to vector<8x256xf32>
    %121 = arith.addf %120, %119 : vector<8x256xf32>
    %122 = arith.divf %120, %121 : vector<8x256xf32>
    %123 = vector.extract_strided_slice %117 {offsets = [0, 128], sizes = [8, 128], strides = [1, 1]} : vector<8x256xf32> to vector<8x128xf32>
    %124 = math.tanh %123 : vector<8x128xf32>
    %125 = vector.extract_strided_slice %122 {offsets = [0, 0], sizes = [8, 64], strides = [1, 1]} : vector<8x256xf32> to vector<8x64xf32>
    %126 = vector.extract_strided_slice %122 {offsets = [0, 64], sizes = [8, 64], strides = [1, 1]} : vector<8x256xf32> to vector<8x64xf32>
    %127 = vector.extract_strided_slice %124 {offsets = [0, 0], sizes = [8, 64], strides = [1, 1]} : vector<8x128xf32> to vector<8x64xf32>
    %128 = vector.extract_strided_slice %122 {offsets = [0, 192], sizes = [8, 64], strides = [1, 1]} : vector<8x256xf32> to vector<8x64xf32>
    %129 = arith.mulf %126, %105 : vector<8x64xf32>
    %130 = arith.mulf %125, %127 : vector<8x64xf32>
    %131 = arith.addf %129, %130 : vector<8x64xf32>
    %132 = math.tanh %131 : vector<8x64xf32>
    %133 = arith.mulf %128, %132 : vector<8x64xf32>
    %c5 = arith.constant 5 : index
    %c0_35 = arith.constant 0 : index
    %c0_36 = arith.constant 0 : index
    %134 = vector.load %arg0[%c5, %c0_35, %c0_36] : memref<12x8x1xf32, #tpu.memory_space<vmem>>, vector<1x8x1xf32>
    %135 = vector.shape_cast %134 : vector<1x8x1xf32> to vector<8x1xf32>
    %136 = vector.broadcast %135 : vector<8x1xf32> to vector<8x256xf32>
    %137 = vector.broadcast %0 : vector<1x256xf32> to vector<8x256xf32>
    %138 = arith.mulf %136, %137 : vector<8x256xf32>
    %139 = vector.broadcast %1 : vector<1x256xf32> to vector<8x256xf32>
    %140 = arith.addf %138, %139 : vector<8x256xf32>
    %c0_37 = arith.constant 0 : index
    %c0_38 = arith.constant 0 : index
    %141 = vector.load %arg3[%c0_37, %c0_38] : memref<64x256xf32, #tpu.memory_space<vmem>>, vector<64x256xf32>
    %cst_39 = arith.constant dense<0.000000e+00> : vector<8x256xf32>
    %142 = tpu.matmul %133, %141, %cst_39 {dimension_numbers = #tpu.dot_dimension_numbers<[1], [0], [0], [1], [0, 0, 1, 1], [], []>} : vector<8x64xf32>, vector<64x256xf32>, vector<8x256xf32> -> vector<8x256xf32>
    %143 = arith.addf %140, %142 : vector<8x256xf32>
    %144 = arith.negf %143 : vector<8x256xf32>
    %145 = math.exp %144 : vector<8x256xf32>
    %cst_40 = arith.constant 1.000000e+00 : f32
    %146 = vector.broadcast %cst_40 : f32 to vector<8x256xf32>
    %147 = arith.addf %146, %145 : vector<8x256xf32>
    %148 = arith.divf %146, %147 : vector<8x256xf32>
    %149 = vector.extract_strided_slice %143 {offsets = [0, 128], sizes = [8, 128], strides = [1, 1]} : vector<8x256xf32> to vector<8x128xf32>
    %150 = math.tanh %149 : vector<8x128xf32>
    %151 = vector.extract_strided_slice %148 {offsets = [0, 0], sizes = [8, 64], strides = [1, 1]} : vector<8x256xf32> to vector<8x64xf32>
    %152 = vector.extract_strided_slice %148 {offsets = [0, 64], sizes = [8, 64], strides = [1, 1]} : vector<8x256xf32> to vector<8x64xf32>
    %153 = vector.extract_strided_slice %150 {offsets = [0, 0], sizes = [8, 64], strides = [1, 1]} : vector<8x128xf32> to vector<8x64xf32>
    %154 = vector.extract_strided_slice %148 {offsets = [0, 192], sizes = [8, 64], strides = [1, 1]} : vector<8x256xf32> to vector<8x64xf32>
    %155 = arith.mulf %152, %131 : vector<8x64xf32>
    %156 = arith.mulf %151, %153 : vector<8x64xf32>
    %157 = arith.addf %155, %156 : vector<8x64xf32>
    %158 = math.tanh %157 : vector<8x64xf32>
    %159 = arith.mulf %154, %158 : vector<8x64xf32>
    %c6 = arith.constant 6 : index
    %c0_41 = arith.constant 0 : index
    %c0_42 = arith.constant 0 : index
    %160 = vector.load %arg0[%c6, %c0_41, %c0_42] : memref<12x8x1xf32, #tpu.memory_space<vmem>>, vector<1x8x1xf32>
    %161 = vector.shape_cast %160 : vector<1x8x1xf32> to vector<8x1xf32>
    %162 = vector.broadcast %161 : vector<8x1xf32> to vector<8x256xf32>
    %163 = vector.broadcast %0 : vector<1x256xf32> to vector<8x256xf32>
    %164 = arith.mulf %162, %163 : vector<8x256xf32>
    %165 = vector.broadcast %1 : vector<1x256xf32> to vector<8x256xf32>
    %166 = arith.addf %164, %165 : vector<8x256xf32>
    %c0_43 = arith.constant 0 : index
    %c0_44 = arith.constant 0 : index
    %167 = vector.load %arg3[%c0_43, %c0_44] : memref<64x256xf32, #tpu.memory_space<vmem>>, vector<64x256xf32>
    %cst_45 = arith.constant dense<0.000000e+00> : vector<8x256xf32>
    %168 = tpu.matmul %159, %167, %cst_45 {dimension_numbers = #tpu.dot_dimension_numbers<[1], [0], [0], [1], [0, 0, 1, 1], [], []>} : vector<8x64xf32>, vector<64x256xf32>, vector<8x256xf32> -> vector<8x256xf32>
    %169 = arith.addf %166, %168 : vector<8x256xf32>
    %170 = arith.negf %169 : vector<8x256xf32>
    %171 = math.exp %170 : vector<8x256xf32>
    %cst_46 = arith.constant 1.000000e+00 : f32
    %172 = vector.broadcast %cst_46 : f32 to vector<8x256xf32>
    %173 = arith.addf %172, %171 : vector<8x256xf32>
    %174 = arith.divf %172, %173 : vector<8x256xf32>
    %175 = vector.extract_strided_slice %169 {offsets = [0, 128], sizes = [8, 128], strides = [1, 1]} : vector<8x256xf32> to vector<8x128xf32>
    %176 = math.tanh %175 : vector<8x128xf32>
    %177 = vector.extract_strided_slice %174 {offsets = [0, 0], sizes = [8, 64], strides = [1, 1]} : vector<8x256xf32> to vector<8x64xf32>
    %178 = vector.extract_strided_slice %174 {offsets = [0, 64], sizes = [8, 64], strides = [1, 1]} : vector<8x256xf32> to vector<8x64xf32>
    %179 = vector.extract_strided_slice %176 {offsets = [0, 0], sizes = [8, 64], strides = [1, 1]} : vector<8x128xf32> to vector<8x64xf32>
    %180 = vector.extract_strided_slice %174 {offsets = [0, 192], sizes = [8, 64], strides = [1, 1]} : vector<8x256xf32> to vector<8x64xf32>
    %181 = arith.mulf %178, %157 : vector<8x64xf32>
    %182 = arith.mulf %177, %179 : vector<8x64xf32>
    %183 = arith.addf %181, %182 : vector<8x64xf32>
    %184 = math.tanh %183 : vector<8x64xf32>
    %185 = arith.mulf %180, %184 : vector<8x64xf32>
    %c7 = arith.constant 7 : index
    %c0_47 = arith.constant 0 : index
    %c0_48 = arith.constant 0 : index
    %186 = vector.load %arg0[%c7, %c0_47, %c0_48] : memref<12x8x1xf32, #tpu.memory_space<vmem>>, vector<1x8x1xf32>
    %187 = vector.shape_cast %186 : vector<1x8x1xf32> to vector<8x1xf32>
    %188 = vector.broadcast %187 : vector<8x1xf32> to vector<8x256xf32>
    %189 = vector.broadcast %0 : vector<1x256xf32> to vector<8x256xf32>
    %190 = arith.mulf %188, %189 : vector<8x256xf32>
    %191 = vector.broadcast %1 : vector<1x256xf32> to vector<8x256xf32>
    %192 = arith.addf %190, %191 : vector<8x256xf32>
    %c0_49 = arith.constant 0 : index
    %c0_50 = arith.constant 0 : index
    %193 = vector.load %arg3[%c0_49, %c0_50] : memref<64x256xf32, #tpu.memory_space<vmem>>, vector<64x256xf32>
    %cst_51 = arith.constant dense<0.000000e+00> : vector<8x256xf32>
    %194 = tpu.matmul %185, %193, %cst_51 {dimension_numbers = #tpu.dot_dimension_numbers<[1], [0], [0], [1], [0, 0, 1, 1], [], []>} : vector<8x64xf32>, vector<64x256xf32>, vector<8x256xf32> -> vector<8x256xf32>
    %195 = arith.addf %192, %194 : vector<8x256xf32>
    %196 = arith.negf %195 : vector<8x256xf32>
    %197 = math.exp %196 : vector<8x256xf32>
    %cst_52 = arith.constant 1.000000e+00 : f32
    %198 = vector.broadcast %cst_52 : f32 to vector<8x256xf32>
    %199 = arith.addf %198, %197 : vector<8x256xf32>
    %200 = arith.divf %198, %199 : vector<8x256xf32>
    %201 = vector.extract_strided_slice %195 {offsets = [0, 128], sizes = [8, 128], strides = [1, 1]} : vector<8x256xf32> to vector<8x128xf32>
    %202 = math.tanh %201 : vector<8x128xf32>
    %203 = vector.extract_strided_slice %200 {offsets = [0, 0], sizes = [8, 64], strides = [1, 1]} : vector<8x256xf32> to vector<8x64xf32>
    %204 = vector.extract_strided_slice %200 {offsets = [0, 64], sizes = [8, 64], strides = [1, 1]} : vector<8x256xf32> to vector<8x64xf32>
    %205 = vector.extract_strided_slice %202 {offsets = [0, 0], sizes = [8, 64], strides = [1, 1]} : vector<8x128xf32> to vector<8x64xf32>
    %206 = vector.extract_strided_slice %200 {offsets = [0, 192], sizes = [8, 64], strides = [1, 1]} : vector<8x256xf32> to vector<8x64xf32>
    %207 = arith.mulf %204, %183 : vector<8x64xf32>
    %208 = arith.mulf %203, %205 : vector<8x64xf32>
    %209 = arith.addf %207, %208 : vector<8x64xf32>
    %210 = math.tanh %209 : vector<8x64xf32>
    %211 = arith.mulf %206, %210 : vector<8x64xf32>
    %c8 = arith.constant 8 : index
    %c0_53 = arith.constant 0 : index
    %c0_54 = arith.constant 0 : index
    %212 = vector.load %arg0[%c8, %c0_53, %c0_54] : memref<12x8x1xf32, #tpu.memory_space<vmem>>, vector<1x8x1xf32>
    %213 = vector.shape_cast %212 : vector<1x8x1xf32> to vector<8x1xf32>
    %214 = vector.broadcast %213 : vector<8x1xf32> to vector<8x256xf32>
    %215 = vector.broadcast %0 : vector<1x256xf32> to vector<8x256xf32>
    %216 = arith.mulf %214, %215 : vector<8x256xf32>
    %217 = vector.broadcast %1 : vector<1x256xf32> to vector<8x256xf32>
    %218 = arith.addf %216, %217 : vector<8x256xf32>
    %c0_55 = arith.constant 0 : index
    %c0_56 = arith.constant 0 : index
    %219 = vector.load %arg3[%c0_55, %c0_56] : memref<64x256xf32, #tpu.memory_space<vmem>>, vector<64x256xf32>
    %cst_57 = arith.constant dense<0.000000e+00> : vector<8x256xf32>
    %220 = tpu.matmul %211, %219, %cst_57 {dimension_numbers = #tpu.dot_dimension_numbers<[1], [0], [0], [1], [0, 0, 1, 1], [], []>} : vector<8x64xf32>, vector<64x256xf32>, vector<8x256xf32> -> vector<8x256xf32>
    %221 = arith.addf %218, %220 : vector<8x256xf32>
    %222 = arith.negf %221 : vector<8x256xf32>
    %223 = math.exp %222 : vector<8x256xf32>
    %cst_58 = arith.constant 1.000000e+00 : f32
    %224 = vector.broadcast %cst_58 : f32 to vector<8x256xf32>
    %225 = arith.addf %224, %223 : vector<8x256xf32>
    %226 = arith.divf %224, %225 : vector<8x256xf32>
    %227 = vector.extract_strided_slice %221 {offsets = [0, 128], sizes = [8, 128], strides = [1, 1]} : vector<8x256xf32> to vector<8x128xf32>
    %228 = math.tanh %227 : vector<8x128xf32>
    %229 = vector.extract_strided_slice %226 {offsets = [0, 0], sizes = [8, 64], strides = [1, 1]} : vector<8x256xf32> to vector<8x64xf32>
    %230 = vector.extract_strided_slice %226 {offsets = [0, 64], sizes = [8, 64], strides = [1, 1]} : vector<8x256xf32> to vector<8x64xf32>
    %231 = vector.extract_strided_slice %228 {offsets = [0, 0], sizes = [8, 64], strides = [1, 1]} : vector<8x128xf32> to vector<8x64xf32>
    %232 = vector.extract_strided_slice %226 {offsets = [0, 192], sizes = [8, 64], strides = [1, 1]} : vector<8x256xf32> to vector<8x64xf32>
    %233 = arith.mulf %230, %209 : vector<8x64xf32>
    %234 = arith.mulf %229, %231 : vector<8x64xf32>
    %235 = arith.addf %233, %234 : vector<8x64xf32>
    %236 = math.tanh %235 : vector<8x64xf32>
    %237 = arith.mulf %232, %236 : vector<8x64xf32>
    %c9 = arith.constant 9 : index
    %c0_59 = arith.constant 0 : index
    %c0_60 = arith.constant 0 : index
    %238 = vector.load %arg0[%c9, %c0_59, %c0_60] : memref<12x8x1xf32, #tpu.memory_space<vmem>>, vector<1x8x1xf32>
    %239 = vector.shape_cast %238 : vector<1x8x1xf32> to vector<8x1xf32>
    %240 = vector.broadcast %239 : vector<8x1xf32> to vector<8x256xf32>
    %241 = vector.broadcast %0 : vector<1x256xf32> to vector<8x256xf32>
    %242 = arith.mulf %240, %241 : vector<8x256xf32>
    %243 = vector.broadcast %1 : vector<1x256xf32> to vector<8x256xf32>
    %244 = arith.addf %242, %243 : vector<8x256xf32>
    %c0_61 = arith.constant 0 : index
    %c0_62 = arith.constant 0 : index
    %245 = vector.load %arg3[%c0_61, %c0_62] : memref<64x256xf32, #tpu.memory_space<vmem>>, vector<64x256xf32>
    %cst_63 = arith.constant dense<0.000000e+00> : vector<8x256xf32>
    %246 = tpu.matmul %237, %245, %cst_63 {dimension_numbers = #tpu.dot_dimension_numbers<[1], [0], [0], [1], [0, 0, 1, 1], [], []>} : vector<8x64xf32>, vector<64x256xf32>, vector<8x256xf32> -> vector<8x256xf32>
    %247 = arith.addf %244, %246 : vector<8x256xf32>
    %248 = arith.negf %247 : vector<8x256xf32>
    %249 = math.exp %248 : vector<8x256xf32>
    %cst_64 = arith.constant 1.000000e+00 : f32
    %250 = vector.broadcast %cst_64 : f32 to vector<8x256xf32>
    %251 = arith.addf %250, %249 : vector<8x256xf32>
    %252 = arith.divf %250, %251 : vector<8x256xf32>
    %253 = vector.extract_strided_slice %247 {offsets = [0, 128], sizes = [8, 128], strides = [1, 1]} : vector<8x256xf32> to vector<8x128xf32>
    %254 = math.tanh %253 : vector<8x128xf32>
    %255 = vector.extract_strided_slice %252 {offsets = [0, 0], sizes = [8, 64], strides = [1, 1]} : vector<8x256xf32> to vector<8x64xf32>
    %256 = vector.extract_strided_slice %252 {offsets = [0, 64], sizes = [8, 64], strides = [1, 1]} : vector<8x256xf32> to vector<8x64xf32>
    %257 = vector.extract_strided_slice %254 {offsets = [0, 0], sizes = [8, 64], strides = [1, 1]} : vector<8x128xf32> to vector<8x64xf32>
    %258 = vector.extract_strided_slice %252 {offsets = [0, 192], sizes = [8, 64], strides = [1, 1]} : vector<8x256xf32> to vector<8x64xf32>
    %259 = arith.mulf %256, %235 : vector<8x64xf32>
    %260 = arith.mulf %255, %257 : vector<8x64xf32>
    %261 = arith.addf %259, %260 : vector<8x64xf32>
    %262 = math.tanh %261 : vector<8x64xf32>
    %263 = arith.mulf %258, %262 : vector<8x64xf32>
    %c10 = arith.constant 10 : index
    %c0_65 = arith.constant 0 : index
    %c0_66 = arith.constant 0 : index
    %264 = vector.load %arg0[%c10, %c0_65, %c0_66] : memref<12x8x1xf32, #tpu.memory_space<vmem>>, vector<1x8x1xf32>
    %265 = vector.shape_cast %264 : vector<1x8x1xf32> to vector<8x1xf32>
    %266 = vector.broadcast %265 : vector<8x1xf32> to vector<8x256xf32>
    %267 = vector.broadcast %0 : vector<1x256xf32> to vector<8x256xf32>
    %268 = arith.mulf %266, %267 : vector<8x256xf32>
    %269 = vector.broadcast %1 : vector<1x256xf32> to vector<8x256xf32>
    %270 = arith.addf %268, %269 : vector<8x256xf32>
    %c0_67 = arith.constant 0 : index
    %c0_68 = arith.constant 0 : index
    %271 = vector.load %arg3[%c0_67, %c0_68] : memref<64x256xf32, #tpu.memory_space<vmem>>, vector<64x256xf32>
    %cst_69 = arith.constant dense<0.000000e+00> : vector<8x256xf32>
    %272 = tpu.matmul %263, %271, %cst_69 {dimension_numbers = #tpu.dot_dimension_numbers<[1], [0], [0], [1], [0, 0, 1, 1], [], []>} : vector<8x64xf32>, vector<64x256xf32>, vector<8x256xf32> -> vector<8x256xf32>
    %273 = arith.addf %270, %272 : vector<8x256xf32>
    %274 = arith.negf %273 : vector<8x256xf32>
    %275 = math.exp %274 : vector<8x256xf32>
    %cst_70 = arith.constant 1.000000e+00 : f32
    %276 = vector.broadcast %cst_70 : f32 to vector<8x256xf32>
    %277 = arith.addf %276, %275 : vector<8x256xf32>
    %278 = arith.divf %276, %277 : vector<8x256xf32>
    %279 = vector.extract_strided_slice %273 {offsets = [0, 128], sizes = [8, 128], strides = [1, 1]} : vector<8x256xf32> to vector<8x128xf32>
    %280 = math.tanh %279 : vector<8x128xf32>
    %281 = vector.extract_strided_slice %278 {offsets = [0, 0], sizes = [8, 64], strides = [1, 1]} : vector<8x256xf32> to vector<8x64xf32>
    %282 = vector.extract_strided_slice %278 {offsets = [0, 64], sizes = [8, 64], strides = [1, 1]} : vector<8x256xf32> to vector<8x64xf32>
    %283 = vector.extract_strided_slice %280 {offsets = [0, 0], sizes = [8, 64], strides = [1, 1]} : vector<8x128xf32> to vector<8x64xf32>
    %284 = vector.extract_strided_slice %278 {offsets = [0, 192], sizes = [8, 64], strides = [1, 1]} : vector<8x256xf32> to vector<8x64xf32>
    %285 = arith.mulf %282, %261 : vector<8x64xf32>
    %286 = arith.mulf %281, %283 : vector<8x64xf32>
    %287 = arith.addf %285, %286 : vector<8x64xf32>
    %288 = math.tanh %287 : vector<8x64xf32>
    %289 = arith.mulf %284, %288 : vector<8x64xf32>
    %c11 = arith.constant 11 : index
    %c0_71 = arith.constant 0 : index
    %c0_72 = arith.constant 0 : index
    %290 = vector.load %arg0[%c11, %c0_71, %c0_72] : memref<12x8x1xf32, #tpu.memory_space<vmem>>, vector<1x8x1xf32>
    %291 = vector.shape_cast %290 : vector<1x8x1xf32> to vector<8x1xf32>
    %292 = vector.broadcast %291 : vector<8x1xf32> to vector<8x256xf32>
    %293 = vector.broadcast %0 : vector<1x256xf32> to vector<8x256xf32>
    %294 = arith.mulf %292, %293 : vector<8x256xf32>
    %295 = vector.broadcast %1 : vector<1x256xf32> to vector<8x256xf32>
    %296 = arith.addf %294, %295 : vector<8x256xf32>
    %c0_73 = arith.constant 0 : index
    %c0_74 = arith.constant 0 : index
    %297 = vector.load %arg3[%c0_73, %c0_74] : memref<64x256xf32, #tpu.memory_space<vmem>>, vector<64x256xf32>
    %cst_75 = arith.constant dense<0.000000e+00> : vector<8x256xf32>
    %298 = tpu.matmul %289, %297, %cst_75 {dimension_numbers = #tpu.dot_dimension_numbers<[1], [0], [0], [1], [0, 0, 1, 1], [], []>} : vector<8x64xf32>, vector<64x256xf32>, vector<8x256xf32> -> vector<8x256xf32>
    %299 = arith.addf %296, %298 : vector<8x256xf32>
    %300 = arith.negf %299 : vector<8x256xf32>
    %301 = math.exp %300 : vector<8x256xf32>
    %cst_76 = arith.constant 1.000000e+00 : f32
    %302 = vector.broadcast %cst_76 : f32 to vector<8x256xf32>
    %303 = arith.addf %302, %301 : vector<8x256xf32>
    %304 = arith.divf %302, %303 : vector<8x256xf32>
    %305 = vector.extract_strided_slice %299 {offsets = [0, 128], sizes = [8, 128], strides = [1, 1]} : vector<8x256xf32> to vector<8x128xf32>
    %306 = math.tanh %305 : vector<8x128xf32>
    %307 = vector.extract_strided_slice %304 {offsets = [0, 0], sizes = [8, 64], strides = [1, 1]} : vector<8x256xf32> to vector<8x64xf32>
    %308 = vector.extract_strided_slice %304 {offsets = [0, 64], sizes = [8, 64], strides = [1, 1]} : vector<8x256xf32> to vector<8x64xf32>
    %309 = vector.extract_strided_slice %306 {offsets = [0, 0], sizes = [8, 64], strides = [1, 1]} : vector<8x128xf32> to vector<8x64xf32>
    %310 = vector.extract_strided_slice %304 {offsets = [0, 192], sizes = [8, 64], strides = [1, 1]} : vector<8x256xf32> to vector<8x64xf32>
    %311 = arith.mulf %308, %287 : vector<8x64xf32>
    %312 = arith.mulf %307, %309 : vector<8x64xf32>
    %313 = arith.addf %311, %312 : vector<8x64xf32>
    %314 = math.tanh %313 : vector<8x64xf32>
    %315 = arith.mulf %310, %314 : vector<8x64xf32>
    %c0_77 = arith.constant 0 : index
    %c0_78 = arith.constant 0 : index
    %316 = vector.load %arg4[%c0_77, %c0_78] : memref<1x64xf32, #tpu.memory_space<vmem>>, vector<1x64xf32>
    %317 = vector.broadcast %316 : vector<1x64xf32> to vector<8x64xf32>
    %318 = arith.mulf %315, %317 : vector<8x64xf32>
    %cst_79 = arith.constant dense<0.000000e+00> : vector<8xf32>
    %319 = vector.multi_reduction <add>, %318, %cst_79 [1] : vector<8x64xf32> to vector<8xf32>
    %320 = vector.shape_cast %319 : vector<8xf32> to vector<8x1xf32>
    %c0_80 = arith.constant 0 : index
    %c0_81 = arith.constant 0 : index
    %321 = vector.load %arg5[%c0_80, %c0_81] : memref<1x1xf32, #tpu.memory_space<vmem>>, vector<1x1xf32>
    %322 = vector.broadcast %321 : vector<1x1xf32> to vector<8x1xf32>
    %323 = arith.addf %320, %322 : vector<8x1xf32>
    %c0_82 = arith.constant 0 : index
    %c0_83 = arith.constant 0 : index
    %324 = vector.load %arg6[%c0_82, %c0_83] : memref<8x1xf32, #tpu.memory_space<vmem>>, vector<8x1xf32>
    tpu.vector_store %arg6[%c0_82, %c0_83], %323 {strides = array<i32>} : memref<8x1xf32, #tpu.memory_space<vmem>>, vector<8x1xf32>,
    return
  }
}

</mosaic_0001>

<llo_original>
// kernel: lstm_model_forward.1
$region0: #{lstm_model_forward.1}
  #allocation0 [shape = 'u32[]', space=smem, size = 0x4, offset = 0x4, fixed_abs, tag = 'smem constant byte address 0x4 - core index']
  #allocation1 [shape = 'u32[144,128]{1,0:T(1,128)}', space=vmem, size = 0x12000, scoped, tag = 'internal scratch']
  #allocation2 [shape = 'f32[1,1]{1,0:T(1,128)S(1)}', space=vmem, size = 0x200, scoped, tag = 'scoped memory for lstm_model_forward.1']
  %s0 = inlined_call_operand.vmem [shape: f32[12,8,1], index: 0, kind: input, shape index: {}]
  %s1 = inlined_call_operand.vmem [shape: f32[1,256], index: 1, kind: input, shape index: {}]
  %s2 = inlined_call_operand.vmem [shape: f32[1,256], index: 2, kind: input, shape index: {}]
  %s3 = inlined_call_operand.vmem [shape: f32[64,256], index: 3, kind: input, shape index: {}]
  %s4 = inlined_call_operand.vmem [shape: f32[1,64], index: 4, kind: input, shape index: {}]
  %s5 = inlined_call_operand.<no memory space> [shape: f32[1,1], index: 5, kind: input, shape index: {}]
  %s6 = inlined_call_operand.vmem [shape: f32[8,1], index: 6, kind: output, shape index: {}]
  %s7 = sld [smem:[#allocation0]]
  $region34: #{lstm_model_forward.1} parent=0
    _
  %s9 = ssub.s32 1, %s7
  %s10 = scalar_select 0, %s9, %s7
  %v11 = vstv %s5
  %12 = vst [vmem:[#allocation2] sm:$0x1] %v11
  // Predicated region
  $region2: #{lstm_model_forward.1} parent=0 // pred_check
    _
  $region3: #{lstm_model_forward.1} parent=0 // pred_check_branch
    %14 = sbr.rel (0) target = $region5
  $region4: #{lstm_model_forward.1} parent=0 // pred_region
    _
  $region5: #{lstm_model_forward.1} parent=0 // pred_fallthru
    _
  // Predicated region
  $region6: #{lstm_model_forward.1} parent=0 // pred_check
    _
  $region7: #{lstm_model_forward.1} parent=0 // pred_check_branch
    %16 = sbr.rel (0) target = $region9
  $region8: #{lstm_model_forward.1} parent=0 // pred_region
    _
  $region9: #{lstm_model_forward.1} parent=0 // pred_fallthru
    _
  // Predicated region
  $region10: #{lstm_model_forward.1} parent=0 // pred_check
    _
  $region11: #{lstm_model_forward.1} parent=0 // pred_check_branch
    %18 = sbr.rel (0) target = $region13
  $region12: #{lstm_model_forward.1} parent=0 // pred_region
    _
  $region13: #{lstm_model_forward.1} parent=0 // pred_fallthru
    _
  // Predicated region
  $region14: #{lstm_model_forward.1} parent=0 // pred_check
    _
  $region15: #{lstm_model_forward.1} parent=0 // pred_check_branch
    %20 = sbr.rel (0) target = $region17
  $region16: #{lstm_model_forward.1} parent=0 // pred_region
    _
  $region17: #{lstm_model_forward.1} parent=0 // pred_fallthru
    _
  // Predicated region
  $region18: #{lstm_model_forward.1} parent=0 // pred_check
    _
  $region19: #{lstm_model_forward.1} parent=0 // pred_check_branch
    %22 = sbr.rel (0) target = $region21
  $region20: #{lstm_model_forward.1} parent=0 // pred_region
    _
  $region21: #{lstm_model_forward.1} parent=0 // pred_fallthru
    _
  // Predicated region
  $region22: #{lstm_model_forward.1} parent=0 // pred_check
    _
  $region23: #{lstm_model_forward.1} parent=0 // pred_check_branch
    %24 = sbr.rel (0) target = $region25
  $region24: #{lstm_model_forward.1} parent=0 // pred_region
    _
  $region25: #{lstm_model_forward.1} parent=0 // pred_fallthru
    _
  %v25 = vld [vmem:[%s1] sm:$0x3]
  %v26 = vld [vmem:[%s2] sm:$0x3]
  %v27 = vld [vmem:[%s0] sm:$0xff]
  %29 = vset.pattern.permute.xlu0 0
  %30 = vperm.xlu0 %29, %v27
  %v31 = vpop.permute.xlu0 %30
  %v34 = vlaneseq
  %v35 = vshrl.u32 %v34, 7
  %v36 = vsub.s32 0, %v35
  %v37 = vrot.slane %v25, %v36
  %v38 = vlaneseq
  %v39 = vshrl.u32 %v38, 7
  %v40 = vsub.s32 1, %v39
  %v41 = vrot.slane %v25, %v40
  %v44 = vmul.f32 %v31, %v37
  %v45 = vmul.f32 %v31, %v41
  %v47 = vlaneseq
  %v48 = vshrl.u32 %v47, 7
  %v49 = vsub.s32 0, %v48
  %v50 = vrot.slane %v26, %v49
  %v51 = vlaneseq
  %v52 = vshrl.u32 %v51, 7
  %v53 = vsub.s32 1, %v52
  %v54 = vrot.slane %v26, %v53
  %v57 = vadd.f32 %v44, %v50
  %v58 = vadd.f32 %v45, %v54
  %v59 = vld [vmem:[%s3] sm:$0xff]
  %v60 = vld [vmem:[%s3 + $0x8] sm:$0xff]
  %v61 = vld [vmem:[%s3 + $0x10] sm:$0xff]
  %v62 = vld [vmem:[%s3 + $0x18] sm:$0xff]
  %v63 = vld [vmem:[%s3 + $0x20] sm:$0xff]
  %v64 = vld [vmem:[%s3 + $0x28] sm:$0xff]
  %v65 = vld [vmem:[%s3 + $0x30] sm:$0xff]
  %v66 = vld [vmem:[%s3 + $0x38] sm:$0xff]
  %v67 = vld [vmem:[%s3 + $0x40] sm:$0xff]
  %v68 = vld [vmem:[%s3 + $0x48] sm:$0xff]
  %v69 = vld [vmem:[%s3 + $0x50] sm:$0xff]
  %v70 = vld [vmem:[%s3 + $0x58] sm:$0xff]
  %v71 = vld [vmem:[%s3 + $0x60] sm:$0xff]
  %v72 = vld [vmem:[%s3 + $0x68] sm:$0xff]
  %v73 = vld [vmem:[%s3 + $0x70] sm:$0xff]
  %v74 = vld [vmem:[%s3 + $0x78] sm:$0xff]
  %vm75 = vcmask 523264
  %v77 = vsel %vm75, 0.0, 0
  %79 = vmatprep.subr.mxu0 %v60
  %80 = vmatpush1.msra.mxu0 %v59
  %81 = vmatprep.subr.mxu0 %v62
  %82 = vmatpush1.msra.mxu0 %v61
  %83 = vmatprep.subr.mxu0 %v64
  %84 = vmatpush1.msra.mxu0 %v63
  %85 = vmatprep.subr.mxu0 %v66
  %86 = vmatpush1.msra.mxu0 %v65
  %87 = vmatprep.subr.mxu0 %v68
  %88 = vmatpush1.msra.mxu0 %v67
  %89 = vmatprep.subr.mxu0 %v70
  %90 = vmatpush1.msra.mxu0 %v69
  %91 = vmatprep.subr.mxu0 %v72
  %92 = vmatpush1.msra.mxu0 %v71
  %93 = vmatprep.subr.mxu0 %v74
  %94 = vmatpush1.msra.mxu0 %v73
  %95 = vmatprep.subr.mxu0 0.0
  %96 = vmatpush1.msra.mxu0 0.0
  %97 = vmatprep.subr.mxu0 0.0
  %98 = vmatpush1.msra.mxu0 0.0
  %99 = vmatprep.subr.mxu0 0.0
  %100 = vmatpush1.msra.mxu0 0.0
  %101 = vmatprep.subr.mxu0 0.0
  %102 = vmatpush1.msra.mxu0 0.0
  %103 = vmatprep.subr.mxu0 0.0
  %104 = vmatpush1.msra.mxu0 0.0
  %105 = vmatprep.subr.mxu0 0.0
  %106 = vmatpush1.msra.mxu0 0.0
  %107 = vmatprep.subr.mxu0 0.0
  %108 = vmatpush1.msra.mxu0 0.0
  %109 = vmatprep.subr.mxu0 0.0
  %110 = vmatpush1.msra.mxu0 0.0
  %111 = vmatprep.subr.mxu0 0.0
  %112 = vmatpush1.msra.mxu0 0.0
  %113 = vmatprep.subr.mxu0 0.0
  %114 = vmatpush1.msra.mxu0 0.0
  %115 = vmatprep.subr.mxu0 0.0
  %116 = vmatpush1.msra.mxu0 0.0
  %117 = vmatprep.subr.mxu0 0.0
  %118 = vmatpush1.msra.mxu0 0.0
  %119 = vmatprep.subr.mxu0 0.0
  %120 = vmatpush1.msra.mxu0 0.0
  %121 = vmatprep.subr.mxu0 0.0
  %122 = vmatpush1.msra.mxu0 0.0
  %123 = vmatprep.subr.mxu0 0.0
  %124 = vmatpush1.msra.mxu0 0.0
  %125 = vmatprep.subr.mxu0 0.0
  %126 = vmatpush1.msra.mxu0 0.0
  %127 = vmatprep.subr.mxu0 0.0
  %128 = vmatpush1.msra.mxu0 0.0
  %129 = vmatprep.subr.mxu0 0.0
  %130 = vmatpush1.msra.mxu0 0.0
  %131 = vmatprep.subr.mxu0 0.0
  %132 = vmatpush1.msra.mxu0 0.0
  %133 = vmatprep.subr.mxu0 0.0
  %134 = vmatpush1.msra.mxu0 0.0
  %135 = vmatprep.subr.mxu0 0.0
  %136 = vmatpush1.msra.mxu0 0.0
  %137 = vmatprep.subr.mxu0 0.0
  %138 = vmatpush1.msra.mxu0 0.0
  %139 = vmatprep.subr.mxu0 0.0
  %140 = vmatpush1.msra.mxu0 0.0
  %141 = vmatprep.subr.mxu0 0.0
  %142 = vmatpush1.msra.mxu0 0.0
  %143 = vmatprep.mubr.f32.mxu0 0.0
  %144 = vmatmul.mubr.f32.gmra.mrb[0].mxu0 %v77
  %v145 = vpop.f32.mrb[0].mxu0
  %v146 = vadd.f32 0.0, %v145
  %v147 = vpop.f32.mrb[0].mxu0
  %v148 = vadd.f32 0.0, %v147
  %149 = vdwg.mxu0
  %v150 = vadd.f32 %v57, %v146
  %v151 = vadd.f32 %v58, %v148
  %v152 = vxor.u32 %v150, 2147483648
  %v153 = vxor.u32 %v151, 2147483648
  %v154 = vmul.f32 %v152, 1.442695
  %v155 = vpow.pop %v154
  %v156 = vmul.f32 %v153, 1.442695
  %v157 = vpow.pop %v156
  %v158 = vadd.f32 %v155, 1.0
  %v159 = vadd.f32 %v157, 1.0
  %v160 = vrcp.pop %v158
  %v161 = vmul.f32 1.0, %v160
  %v162 = vrcp.pop %v159
  %v163 = vmul.f32 1.0, %v162
  %v164 = vtanh.pop %v151
  %v165 = vmul.f32 %v161, 0.0
  %v166 = vmul.f32 %v161, %v164
  %168 = vrot.lane.b32.xlu0 %v166, 64
  %v169 = vpop.permute.xlu0 %168
  %v171 = vadd.f32 %v165, %v169
  %v172 = vtanh.pop %v171
  %v173 = vmul.f32 %v163, %v172
  %s174 = scalar_lea.vmem %s0, 8
  %v175 = vld [vmem:[%s174] sm:$0xff]
  %177 = vset.pattern.permute.xlu0 0
  %178 = vperm.xlu0 %177, %v175
  %v179 = vpop.permute.xlu0 %178
  %v181 = vmul.f32 %v179, %v37
  %v182 = vmul.f32 %v179, %v41
  %v183 = vadd.f32 %v181, %v50
  %v184 = vadd.f32 %v182, %v54
  %186 = vrot.lane.b32.xlu0 %v173, 64
  %v187 = vpop.permute.xlu0 %186
  %v188 = vsel %vm75, %v187, 0
  %190 = vmatprep.subr.mxu0 %v60
  %191 = vmatpush1.msra.mxu0 %v59
  %192 = vmatprep.subr.mxu0 %v62
  %193 = vmatpush1.msra.mxu0 %v61
  %194 = vmatprep.subr.mxu0 %v64
  %195 = vmatpush1.msra.mxu0 %v63
  %196 = vmatprep.subr.mxu0 %v66
  %197 = vmatpush1.msra.mxu0 %v65
  %198 = vmatprep.subr.mxu0 %v68
  %199 = vmatpush1.msra.mxu0 %v67
  %200 = vmatprep.subr.mxu0 %v70
  %201 = vmatpush1.msra.mxu0 %v69
  %202 = vmatprep.subr.mxu0 %v72
  %203 = vmatpush1.msra.mxu0 %v71
  %204 = vmatprep.subr.mxu0 %v74
  %205 = vmatpush1.msra.mxu0 %v73
  %206 = vmatprep.subr.mxu0 0.0
  %207 = vmatpush1.msra.mxu0 0.0
  %208 = vmatprep.subr.mxu0 0.0
  %209 = vmatpush1.msra.mxu0 0.0
  %210 = vmatprep.subr.mxu0 0.0
  %211 = vmatpush1.msra.mxu0 0.0
  %212 = vmatprep.subr.mxu0 0.0
  %213 = vmatpush1.msra.mxu0 0.0
  %214 = vmatprep.subr.mxu0 0.0
  %215 = vmatpush1.msra.mxu0 0.0
  %216 = vmatprep.subr.mxu0 0.0
  %217 = vmatpush1.msra.mxu0 0.0
  %218 = vmatprep.subr.mxu0 0.0
  %219 = vmatpush1.msra.mxu0 0.0
  %220 = vmatprep.subr.mxu0 0.0
  %221 = vmatpush1.msra.mxu0 0.0
  %222 = vmatprep.subr.mxu0 0.0
  %223 = vmatpush1.msra.mxu0 0.0
  %224 = vmatprep.subr.mxu0 0.0
  %225 = vmatpush1.msra.mxu0 0.0
  %226 = vmatprep.subr.mxu0 0.0
  %227 = vmatpush1.msra.mxu0 0.0
  %228 = vmatprep.subr.mxu0 0.0
  %229 = vmatpush1.msra.mxu0 0.0
  %230 = vmatprep.subr.mxu0 0.0
  %231 = vmatpush1.msra.mxu0 0.0
  %232 = vmatprep.subr.mxu0 0.0
  %233 = vmatpush1.msra.mxu0 0.0
  %234 = vmatprep.subr.mxu0 0.0
  %235 = vmatpush1.msra.mxu0 0.0
  %236 = vmatprep.subr.mxu0 0.0
  %237 = vmatpush1.msra.mxu0 0.0
  %238 = vmatprep.subr.mxu0 0.0
  %239 = vmatpush1.msra.mxu0 0.0
  %240 = vmatprep.subr.mxu0 0.0
  %241 = vmatpush1.msra.mxu0 0.0
  %242 = vmatprep.subr.mxu0 0.0
  %243 = vmatpush1.msra.mxu0 0.0
  %244 = vmatprep.subr.mxu0 0.0
  %245 = vmatpush1.msra.mxu0 0.0
  %246 = vmatprep.subr.mxu0 0.0
  %247 = vmatpush1.msra.mxu0 0.0
  %248 = vmatprep.subr.mxu0 0.0
  %249 = vmatpush1.msra.mxu0 0.0
  %250 = vmatprep.subr.mxu0 0.0
  %251 = vmatpush1.msra.mxu0 0.0
  %252 = vmatprep.subr.mxu0 0.0
  %253 = vmatpush1.msra.mxu0 0.0
  %254 = vmatprep.mubr.f32.mxu0 0.0
  %255 = vmatmul.mubr.f32.gmra.mrb[0].mxu0 %v188
  %v256 = vpop.f32.mrb[0].mxu0
  %v257 = vadd.f32 0.0, %v256
  %v258 = vpop.f32.mrb[0].mxu0
  %v259 = vadd.f32 0.0, %v258
  %260 = vdwg.mxu0
  %v261 = vadd.f32 %v183, %v257
  %v262 = vadd.f32 %v184, %v259
  %v263 = vxor.u32 %v261, 2147483648
  %v264 = vxor.u32 %v262, 2147483648
  %v265 = vmul.f32 %v263, 1.442695
  %v266 = vpow.pop %v265
  %v267 = vmul.f32 %v264, 1.442695
  %v268 = vpow.pop %v267
  %v269 = vadd.f32 %v266, 1.0
  %v270 = vadd.f32 %v268, 1.0
  %v271 = vrcp.pop %v269
  %v272 = vmul.f32 1.0, %v271
  %v273 = vrcp.pop %v270
  %v274 = vmul.f32 1.0, %v273
  %v275 = vtanh.pop %v262
  %v276 = vmul.f32 %v272, %v171
  %v277 = vmul.f32 %v272, %v275
  %279 = vrot.lane.b32.xlu0 %v277, 64
  %v280 = vpop.permute.xlu0 %279
  %v282 = vadd.f32 %v276, %v280
  %v283 = vtanh.pop %v282
  %v284 = vmul.f32 %v274, %v283
  %s285 = scalar_lea.vmem %s0, 16
  %v286 = vld [vmem:[%s285] sm:$0xff]
  %288 = vset.pattern.permute.xlu0 0
  %289 = vperm.xlu0 %288, %v286
  %v290 = vpop.permute.xlu0 %289
  %v292 = vmul.f32 %v290, %v37
  %v293 = vmul.f32 %v290, %v41
  %v294 = vadd.f32 %v292, %v50
  %v295 = vadd.f32 %v293, %v54
  %297 = vrot.lane.b32.xlu0 %v284, 64
  %v298 = vpop.permute.xlu0 %297
  %v299 = vsel %vm75, %v298, 0
  %301 = vmatprep.subr.mxu0 %v60
  %302 = vmatpush1.msra.mxu0 %v59
  %303 = vmatprep.subr.mxu0 %v62
  %304 = vmatpush1.msra.mxu0 %v61
  %305 = vmatprep.subr.mxu0 %v64
  %306 = vmatpush1.msra.mxu0 %v63
  %307 = vmatprep.subr.mxu0 %v66
  %308 = vmatpush1.msra.mxu0 %v65
  %309 = vmatprep.subr.mxu0 %v68
  %310 = vmatpush1.msra.mxu0 %v67
  %311 = vmatprep.subr.mxu0 %v70
  %312 = vmatpush1.msra.mxu0 %v69
  %313 = vmatprep.subr.mxu0 %v72
  %314 = vmatpush1.msra.mxu0 %v71
  %315 = vmatprep.subr.mxu0 %v74
  %316 = vmatpush1.msra.mxu0 %v73
  %317 = vmatprep.subr.mxu0 0.0
  %318 = vmatpush1.msra.mxu0 0.0
  %319 = vmatprep.subr.mxu0 0.0
  %320 = vmatpush1.msra.mxu0 0.0
  %321 = vmatprep.subr.mxu0 0.0
  %322 = vmatpush1.msra.mxu0 0.0
  %323 = vmatprep.subr.mxu0 0.0
  %324 = vmatpush1.msra.mxu0 0.0
  %325 = vmatprep.subr.mxu0 0.0
  %326 = vmatpush1.msra.mxu0 0.0
  %327 = vmatprep.subr.mxu0 0.0
  %328 = vmatpush1.msra.mxu0 0.0
  %329 = vmatprep.subr.mxu0 0.0
  %330 = vmatpush1.msra.mxu0 0.0
  %331 = vmatprep.subr.mxu0 0.0
  %332 = vmatpush1.msra.mxu0 0.0
  %333 = vmatprep.subr.mxu0 0.0
  %334 = vmatpush1.msra.mxu0 0.0
  %335 = vmatprep.subr.mxu0 0.0
  %336 = vmatpush1.msra.mxu0 0.0
  %337 = vmatprep.subr.mxu0 0.0
  %338 = vmatpush1.msra.mxu0 0.0
  %339 = vmatprep.subr.mxu0 0.0
  %340 = vmatpush1.msra.mxu0 0.0
  %341 = vmatprep.subr.mxu0 0.0
  %342 = vmatpush1.msra.mxu0 0.0
  %343 = vmatprep.subr.mxu0 0.0
  %344 = vmatpush1.msra.mxu0 0.0
  %345 = vmatprep.subr.mxu0 0.0
  %346 = vmatpush1.msra.mxu0 0.0
  %347 = vmatprep.subr.mxu0 0.0
  %348 = vmatpush1.msra.mxu0 0.0
  %349 = vmatprep.subr.mxu0 0.0
  %350 = vmatpush1.msra.mxu0 0.0
  %351 = vmatprep.subr.mxu0 0.0
  %352 = vmatpush1.msra.mxu0 0.0
  %353 = vmatprep.subr.mxu0 0.0
  %354 = vmatpush1.msra.mxu0 0.0
  %355 = vmatprep.subr.mxu0 0.0
  %356 = vmatpush1.msra.mxu0 0.0
  %357 = vmatprep.subr.mxu0 0.0
  %358 = vmatpush1.msra.mxu0 0.0
  %359 = vmatprep.subr.mxu0 0.0
  %360 = vmatpush1.msra.mxu0 0.0
  %361 = vmatprep.subr.mxu0 0.0
  %362 = vmatpush1.msra.mxu0 0.0
  %363 = vmatprep.subr.mxu0 0.0
  %364 = vmatpush1.msra.mxu0 0.0
  %365 = vmatprep.mubr.f32.mxu0 0.0
  %366 = vmatmul.mubr.f32.gmra.mrb[0].mxu0 %v299
  %v367 = vpop.f32.mrb[0].mxu0
  %v368 = vadd.f32 0.0, %v367
  %v369 = vpop.f32.mrb[0].mxu0
  %v370 = vadd.f32 0.0, %v369
  %371 = vdwg.mxu0
  %v372 = vadd.f32 %v294, %v368
  %v373 = vadd.f32 %v295, %v370
  %v374 = vxor.u32 %v372, 2147483648
  %v375 = vxor.u32 %v373, 2147483648
  %v376 = vmul.f32 %v374, 1.442695
  %v377 = vpow.pop %v376
  %v378 = vmul.f32 %v375, 1.442695
  %v379 = vpow.pop %v378
  %v380 = vadd.f32 %v377, 1.0
  %v381 = vadd.f32 %v379, 1.0
  %v382 = vrcp.pop %v380
  %v383 = vmul.f32 1.0, %v382
  %v384 = vrcp.pop %v381
  %v385 = vmul.f32 1.0, %v384
  %v386 = vtanh.pop %v373
  %v387 = vmul.f32 %v383, %v282
  %v388 = vmul.f32 %v383, %v386
  %390 = vrot.lane.b32.xlu0 %v388, 64
  %v391 = vpop.permute.xlu0 %390
  %v393 = vadd.f32 %v387, %v391
  %v394 = vtanh.pop %v393
  %v395 = vmul.f32 %v385, %v394
  %s396 = scalar_lea.vmem %s0, 24
  %v397 = vld [vmem:[%s396] sm:$0xff]
  %399 = vset.pattern.permute.xlu0 0
  %400 = vperm.xlu0 %399, %v397
  %v401 = vpop.permute.xlu0 %400
  %v403 = vmul.f32 %v401, %v37
  %v404 = vmul.f32 %v401, %v41
  %v405 = vadd.f32 %v403, %v50
  %v406 = vadd.f32 %v404, %v54
  %408 = vrot.lane.b32.xlu0 %v395, 64
  %v409 = vpop.permute.xlu0 %408
  %v410 = vsel %vm75, %v409, 0
  %412 = vmatprep.subr.mxu0 %v60
  %413 = vmatpush1.msra.mxu0 %v59
  %414 = vmatprep.subr.mxu0 %v62
  %415 = vmatpush1.msra.mxu0 %v61
  %416 = vmatprep.subr.mxu0 %v64
  %417 = vmatpush1.msra.mxu0 %v63
  %418 = vmatprep.subr.mxu0 %v66
  %419 = vmatpush1.msra.mxu0 %v65
  %420 = vmatprep.subr.mxu0 %v68
  %421 = vmatpush1.msra.mxu0 %v67
  %422 = vmatprep.subr.mxu0 %v70
  %423 = vmatpush1.msra.mxu0 %v69
  %424 = vmatprep.subr.mxu0 %v72
  %425 = vmatpush1.msra.mxu0 %v71
  %426 = vmatprep.subr.mxu0 %v74
  %427 = vmatpush1.msra.mxu0 %v73
  %428 = vmatprep.subr.mxu0 0.0
  %429 = vmatpush1.msra.mxu0 0.0
  %430 = vmatprep.subr.mxu0 0.0
  %431 = vmatpush1.msra.mxu0 0.0
  %432 = vmatprep.subr.mxu0 0.0
  %433 = vmatpush1.msra.mxu0 0.0
  %434 = vmatprep.subr.mxu0 0.0
  %435 = vmatpush1.msra.mxu0 0.0
  %436 = vmatprep.subr.mxu0 0.0
  %437 = vmatpush1.msra.mxu0 0.0
  %438 = vmatprep.subr.mxu0 0.0
  %439 = vmatpush1.msra.mxu0 0.0
  %440 = vmatprep.subr.mxu0 0.0
  %441 = vmatpush1.msra.mxu0 0.0
  %442 = vmatprep.subr.mxu0 0.0
  %443 = vmatpush1.msra.mxu0 0.0
  %444 = vmatprep.subr.mxu0 0.0
  %445 = vmatpush1.msra.mxu0 0.0
  %446 = vmatprep.subr.mxu0 0.0
  %447 = vmatpush1.msra.mxu0 0.0
  %448 = vmatprep.subr.mxu0 0.0
  %449 = vmatpush1.msra.mxu0 0.0
  %450 = vmatprep.subr.mxu0 0.0
  %451 = vmatpush1.msra.mxu0 0.0
  %452 = vmatprep.subr.mxu0 0.0
  %453 = vmatpush1.msra.mxu0 0.0
  %454 = vmatprep.subr.mxu0 0.0
  %455 = vmatpush1.msra.mxu0 0.0
  %456 = vmatprep.subr.mxu0 0.0
  %457 = vmatpush1.msra.mxu0 0.0
  %458 = vmatprep.subr.mxu0 0.0
  %459 = vmatpush1.msra.mxu0 0.0
  %460 = vmatprep.subr.mxu0 0.0
  %461 = vmatpush1.msra.mxu0 0.0
  %462 = vmatprep.subr.mxu0 0.0
  %463 = vmatpush1.msra.mxu0 0.0
  %464 = vmatprep.subr.mxu0 0.0
  %465 = vmatpush1.msra.mxu0 0.0
  %466 = vmatprep.subr.mxu0 0.0
  %467 = vmatpush1.msra.mxu0 0.0
  %468 = vmatprep.subr.mxu0 0.0
  %469 = vmatpush1.msra.mxu0 0.0
  %470 = vmatprep.subr.mxu0 0.0
  %471 = vmatpush1.msra.mxu0 0.0
  %472 = vmatprep.subr.mxu0 0.0
  %473 = vmatpush1.msra.mxu0 0.0
  %474 = vmatprep.subr.mxu0 0.0
  %475 = vmatpush1.msra.mxu0 0.0
  %476 = vmatprep.mubr.f32.mxu0 0.0
  %477 = vmatmul.mubr.f32.gmra.mrb[0].mxu0 %v410
  %v478 = vpop.f32.mrb[0].mxu0
  %v479 = vadd.f32 0.0, %v478
  %v480 = vpop.f32.mrb[0].mxu0
  %v481 = vadd.f32 0.0, %v480
  %482 = vdwg.mxu0
  %v483 = vadd.f32 %v405, %v479
  %v484 = vadd.f32 %v406, %v481
  %v485 = vxor.u32 %v483, 2147483648
  %v486 = vxor.u32 %v484, 2147483648
  %v487 = vmul.f32 %v485, 1.442695
  %v488 = vpow.pop %v487
  %v489 = vmul.f32 %v486, 1.442695
  %v490 = vpow.pop %v489
  %v491 = vadd.f32 %v488, 1.0
  %v492 = vadd.f32 %v490, 1.0
  %v493 = vrcp.pop %v491
  %v494 = vmul.f32 1.0, %v493
  %v495 = vrcp.pop %v492
  %v496 = vmul.f32 1.0, %v495
  %v497 = vtanh.pop %v484
  %v498 = vmul.f32 %v494, %v393
  %v499 = vmul.f32 %v494, %v497
  %501 = vrot.lane.b32.xlu0 %v499, 64
  %v502 = vpop.permute.xlu0 %501
  %v504 = vadd.f32 %v498, %v502
  %v505 = vtanh.pop %v504
  %v506 = vmul.f32 %v496, %v505
  %s507 = scalar_lea.vmem %s0, 32
  %v508 = vld [vmem:[%s507] sm:$0xff]
  %510 = vset.pattern.permute.xlu0 0
  %511 = vperm.xlu0 %510, %v508
  %v512 = vpop.permute.xlu0 %511
  %v514 = vmul.f32 %v512, %v37
  %v515 = vmul.f32 %v512, %v41
  %v516 = vadd.f32 %v514, %v50
  %v517 = vadd.f32 %v515, %v54
  %519 = vrot.lane.b32.xlu0 %v506, 64
  %v520 = vpop.permute.xlu0 %519
  %v521 = vsel %vm75, %v520, 0
  %523 = vmatprep.subr.mxu0 %v60
  %524 = vmatpush1.msra.mxu0 %v59
  %525 = vmatprep.subr.mxu0 %v62
  %526 = vmatpush1.msra.mxu0 %v61
  %527 = vmatprep.subr.mxu0 %v64
  %528 = vmatpush1.msra.mxu0 %v63
  %529 = vmatprep.subr.mxu0 %v66
  %530 = vmatpush1.msra.mxu0 %v65
  %531 = vmatprep.subr.mxu0 %v68
  %532 = vmatpush1.msra.mxu0 %v67
  %533 = vmatprep.subr.mxu0 %v70
  %534 = vmatpush1.msra.mxu0 %v69
  %535 = vmatprep.subr.mxu0 %v72
  %536 = vmatpush1.msra.mxu0 %v71
  %537 = vmatprep.subr.mxu0 %v74
  %538 = vmatpush1.msra.mxu0 %v73
  %539 = vmatprep.subr.mxu0 0.0
  %540 = vmatpush1.msra.mxu0 0.0
  %541 = vmatprep.subr.mxu0 0.0
  %542 = vmatpush1.msra.mxu0 0.0
  %543 = vmatprep.subr.mxu0 0.0
  %544 = vmatpush1.msra.mxu0 0.0
  %545 = vmatprep.subr.mxu0 0.0
  %546 = vmatpush1.msra.mxu0 0.0
  %547 = vmatprep.subr.mxu0 0.0
  %548 = vmatpush1.msra.mxu0 0.0
  %549 = vmatprep.subr.mxu0 0.0
  %550 = vmatpush1.msra.mxu0 0.0
  %551 = vmatprep.subr.mxu0 0.0
  %552 = vmatpush1.msra.mxu0 0.0
  %553 = vmatprep.subr.mxu0 0.0
  %554 = vmatpush1.msra.mxu0 0.0
  %555 = vmatprep.subr.mxu0 0.0
  %556 = vmatpush1.msra.mxu0 0.0
  %557 = vmatprep.subr.mxu0 0.0
  %558 = vmatpush1.msra.mxu0 0.0
  %559 = vmatprep.subr.mxu0 0.0
  %560 = vmatpush1.msra.mxu0 0.0
  %561 = vmatprep.subr.mxu0 0.0
  %562 = vmatpush1.msra.mxu0 0.0
  %563 = vmatprep.subr.mxu0 0.0
  %564 = vmatpush1.msra.mxu0 0.0
  %565 = vmatprep.subr.mxu0 0.0
  %566 = vmatpush1.msra.mxu0 0.0
  %567 = vmatprep.subr.mxu0 0.0
  %568 = vmatpush1.msra.mxu0 0.0
  %569 = vmatprep.subr.mxu0 0.0
  %570 = vmatpush1.msra.mxu0 0.0
  %571 = vmatprep.subr.mxu0 0.0
  %572 = vmatpush1.msra.mxu0 0.0
  %573 = vmatprep.subr.mxu0 0.0
  %574 = vmatpush1.msra.mxu0 0.0
  %575 = vmatprep.subr.mxu0 0.0
  %576 = vmatpush1.msra.mxu0 0.0
  %577 = vmatprep.subr.mxu0 0.0
  %578 = vmatpush1.msra.mxu0 0.0
  %579 = vmatprep.subr.mxu0 0.0
  %580 = vmatpush1.msra.mxu0 0.0
  %581 = vmatprep.subr.mxu0 0.0
  %582 = vmatpush1.msra.mxu0 0.0
  %583 = vmatprep.subr.mxu0 0.0
  %584 = vmatpush1.msra.mxu0 0.0
  %585 = vmatprep.subr.mxu0 0.0
  %586 = vmatpush1.msra.mxu0 0.0
  %587 = vmatprep.mubr.f32.mxu0 0.0
  %588 = vmatmul.mubr.f32.gmra.mrb[0].mxu0 %v521
  %v589 = vpop.f32.mrb[0].mxu0
  %v590 = vadd.f32 0.0, %v589
  %v591 = vpop.f32.mrb[0].mxu0
  %v592 = vadd.f32 0.0, %v591
  %593 = vdwg.mxu0
  %v594 = vadd.f32 %v516, %v590
  %v595 = vadd.f32 %v517, %v592
  %v596 = vxor.u32 %v594, 2147483648
  %v597 = vxor.u32 %v595, 2147483648
  %v598 = vmul.f32 %v596, 1.442695
  %v599 = vpow.pop %v598
  %v600 = vmul.f32 %v597, 1.442695
  %v601 = vpow.pop %v600
  %v602 = vadd.f32 %v599, 1.0
  %v603 = vadd.f32 %v601, 1.0
  %v604 = vrcp.pop %v602
  %v605 = vmul.f32 1.0, %v604
  %v606 = vrcp.pop %v603
  %v607 = vmul.f32 1.0, %v606
  %v608 = vtanh.pop %v595
  %v609 = vmul.f32 %v605, %v504
  %v610 = vmul.f32 %v605, %v608
  %612 = vrot.lane.b32.xlu0 %v610, 64
  %v613 = vpop.permute.xlu0 %612
  %v615 = vadd.f32 %v609, %v613
  %v616 = vtanh.pop %v615
  %v617 = vmul.f32 %v607, %v616
  %s618 = scalar_lea.vmem %s0, 40
  %v619 = vld [vmem:[%s618] sm:$0xff]
  %621 = vset.pattern.permute.xlu0 0
  %622 = vperm.xlu0 %621, %v619
  %v623 = vpop.permute.xlu0 %622
  %v625 = vmul.f32 %v623, %v37
  %v626 = vmul.f32 %v623, %v41
  %v627 = vadd.f32 %v625, %v50
  %v628 = vadd.f32 %v626, %v54
  %630 = vrot.lane.b32.xlu0 %v617, 64
  %v631 = vpop.permute.xlu0 %630
  %v632 = vsel %vm75, %v631, 0
  %634 = vmatprep.subr.mxu0 %v60
  %635 = vmatpush1.msra.mxu0 %v59
  %636 = vmatprep.subr.mxu0 %v62
  %637 = vmatpush1.msra.mxu0 %v61
  %638 = vmatprep.subr.mxu0 %v64
  %639 = vmatpush1.msra.mxu0 %v63
  %640 = vmatprep.subr.mxu0 %v66
  %641 = vmatpush1.msra.mxu0 %v65
  %642 = vmatprep.subr.mxu0 %v68
  %643 = vmatpush1.msra.mxu0 %v67
  %644 = vmatprep.subr.mxu0 %v70
  %645 = vmatpush1.msra.mxu0 %v69
  %646 = vmatprep.subr.mxu0 %v72
  %647 = vmatpush1.msra.mxu0 %v71
  %648 = vmatprep.subr.mxu0 %v74
  %649 = vmatpush1.msra.mxu0 %v73
  %650 = vmatprep.subr.mxu0 0.0
  %651 = vmatpush1.msra.mxu0 0.0
  %652 = vmatprep.subr.mxu0 0.0
  %653 = vmatpush1.msra.mxu0 0.0
  %654 = vmatprep.subr.mxu0 0.0
  %655 = vmatpush1.msra.mxu0 0.0
  %656 = vmatprep.subr.mxu0 0.0
  %657 = vmatpush1.msra.mxu0 0.0
  %658 = vmatprep.subr.mxu0 0.0
  %659 = vmatpush1.msra.mxu0 0.0
  %660 = vmatprep.subr.mxu0 0.0
  %661 = vmatpush1.msra.mxu0 0.0
  %662 = vmatprep.subr.mxu0 0.0
  %663 = vmatpush1.msra.mxu0 0.0
  %664 = vmatprep.subr.mxu0 0.0
  %665 = vmatpush1.msra.mxu0 0.0
  %666 = vmatprep.subr.mxu0 0.0
  %667 = vmatpush1.msra.mxu0 0.0
  %668 = vmatprep.subr.mxu0 0.0
  %669 = vmatpush1.msra.mxu0 0.0
  %670 = vmatprep.subr.mxu0 0.0
  %671 = vmatpush1.msra.mxu0 0.0
  %672 = vmatprep.subr.mxu0 0.0
  %673 = vmatpush1.msra.mxu0 0.0
  %674 = vmatprep.subr.mxu0 0.0
  %675 = vmatpush1.msra.mxu0 0.0
  %676 = vmatprep.subr.mxu0 0.0
  %677 = vmatpush1.msra.mxu0 0.0
  %678 = vmatprep.subr.mxu0 0.0
  %679 = vmatpush1.msra.mxu0 0.0
  %680 = vmatprep.subr.mxu0 0.0
  %681 = vmatpush1.msra.mxu0 0.0
  %682 = vmatprep.subr.mxu0 0.0
  %683 = vmatpush1.msra.mxu0 0.0
  %684 = vmatprep.subr.mxu0 0.0
  %685 = vmatpush1.msra.mxu0 0.0
  %686 = vmatprep.subr.mxu0 0.0
  %687 = vmatpush1.msra.mxu0 0.0
  %688 = vmatprep.subr.mxu0 0.0
  %689 = vmatpush1.msra.mxu0 0.0
  %690 = vmatprep.subr.mxu0 0.0
  %691 = vmatpush1.msra.mxu0 0.0
  %692 = vmatprep.subr.mxu0 0.0
  %693 = vmatpush1.msra.mxu0 0.0
  %694 = vmatprep.subr.mxu0 0.0
  %695 = vmatpush1.msra.mxu0 0.0
  %696 = vmatprep.subr.mxu0 0.0
  %697 = vmatpush1.msra.mxu0 0.0
  %698 = vmatprep.mubr.f32.mxu0 0.0
  %699 = vmatmul.mubr.f32.gmra.mrb[0].mxu0 %v632
  %v700 = vpop.f32.mrb[0].mxu0
  %v701 = vadd.f32 0.0, %v700
  %v702 = vpop.f32.mrb[0].mxu0
  %v703 = vadd.f32 0.0, %v702
  %704 = vdwg.mxu0
  %v705 = vadd.f32 %v627, %v701
  %v706 = vadd.f32 %v628, %v703
  %v707 = vxor.u32 %v705, 2147483648
  %v708 = vxor.u32 %v706, 2147483648
  %v709 = vmul.f32 %v707, 1.442695
  %v710 = vpow.pop %v709
  %v711 = vmul.f32 %v708, 1.442695
  %v712 = vpow.pop %v711
  %v713 = vadd.f32 %v710, 1.0
  %v714 = vadd.f32 %v712, 1.0
  %v715 = vrcp.pop %v713
  %v716 = vmul.f32 1.0, %v715
  %v717 = vrcp.pop %v714
  %v718 = vmul.f32 1.0, %v717
  %v719 = vtanh.pop %v706
  %v720 = vmul.f32 %v716, %v615
  %v721 = vmul.f32 %v716, %v719
  %723 = vrot.lane.b32.xlu0 %v721, 64
  %v724 = vpop.permute.xlu0 %723
  %v726 = vadd.f32 %v720, %v724
  %v727 = vtanh.pop %v726
  %v728 = vmul.f32 %v718, %v727
  %s729 = scalar_lea.vmem %s0, 48
  %v730 = vld [vmem:[%s729] sm:$0xff]
  %732 = vset.pattern.permute.xlu0 0
  %733 = vperm.xlu0 %732, %v730
  %v734 = vpop.permute.xlu0 %733
  %v736 = vmul.f32 %v734, %v37
  %v737 = vmul.f32 %v734, %v41
  %v738 = vadd.f32 %v736, %v50
  %v739 = vadd.f32 %v737, %v54
  %741 = vrot.lane.b32.xlu0 %v728, 64
  %v742 = vpop.permute.xlu0 %741
  %v743 = vsel %vm75, %v742, 0
  %745 = vmatprep.subr.mxu0 %v60
  %746 = vmatpush1.msra.mxu0 %v59
  %747 = vmatprep.subr.mxu0 %v62
  %748 = vmatpush1.msra.mxu0 %v61
  %749 = vmatprep.subr.mxu0 %v64
  %750 = vmatpush1.msra.mxu0 %v63
  %751 = vmatprep.subr.mxu0 %v66
  %752 = vmatpush1.msra.mxu0 %v65
  %753 = vmatprep.subr.mxu0 %v68
  %754 = vmatpush1.msra.mxu0 %v67
  %755 = vmatprep.subr.mxu0 %v70
  %756 = vmatpush1.msra.mxu0 %v69
  %757 = vmatprep.subr.mxu0 %v72
  %758 = vmatpush1.msra.mxu0 %v71
  %759 = vmatprep.subr.mxu0 %v74
  %760 = vmatpush1.msra.mxu0 %v73
  %761 = vmatprep.subr.mxu0 0.0
  %762 = vmatpush1.msra.mxu0 0.0
  %763 = vmatprep.subr.mxu0 0.0
  %764 = vmatpush1.msra.mxu0 0.0
  %765 = vmatprep.subr.mxu0 0.0
  %766 = vmatpush1.msra.mxu0 0.0
  %767 = vmatprep.subr.mxu0 0.0
  %768 = vmatpush1.msra.mxu0 0.0
  %769 = vmatprep.subr.mxu0 0.0
  %770 = vmatpush1.msra.mxu0 0.0
  %771 = vmatprep.subr.mxu0 0.0
  %772 = vmatpush1.msra.mxu0 0.0
  %773 = vmatprep.subr.mxu0 0.0
  %774 = vmatpush1.msra.mxu0 0.0
  %775 = vmatprep.subr.mxu0 0.0
  %776 = vmatpush1.msra.mxu0 0.0
  %777 = vmatprep.subr.mxu0 0.0
  %778 = vmatpush1.msra.mxu0 0.0
  %779 = vmatprep.subr.mxu0 0.0
  %780 = vmatpush1.msra.mxu0 0.0
  %781 = vmatprep.subr.mxu0 0.0
  %782 = vmatpush1.msra.mxu0 0.0
  %783 = vmatprep.subr.mxu0 0.0
  %784 = vmatpush1.msra.mxu0 0.0
  %785 = vmatprep.subr.mxu0 0.0
  %786 = vmatpush1.msra.mxu0 0.0
  %787 = vmatprep.subr.mxu0 0.0
  %788 = vmatpush1.msra.mxu0 0.0
  %789 = vmatprep.subr.mxu0 0.0
  %790 = vmatpush1.msra.mxu0 0.0
  %791 = vmatprep.subr.mxu0 0.0
  %792 = vmatpush1.msra.mxu0 0.0
  %793 = vmatprep.subr.mxu0 0.0
  %794 = vmatpush1.msra.mxu0 0.0
  %795 = vmatprep.subr.mxu0 0.0
  %796 = vmatpush1.msra.mxu0 0.0
  %797 = vmatprep.subr.mxu0 0.0
  %798 = vmatpush1.msra.mxu0 0.0
  %799 = vmatprep.subr.mxu0 0.0
  %800 = vmatpush1.msra.mxu0 0.0
  %801 = vmatprep.subr.mxu0 0.0
  %802 = vmatpush1.msra.mxu0 0.0
  %803 = vmatprep.subr.mxu0 0.0
  %804 = vmatpush1.msra.mxu0 0.0
  %805 = vmatprep.subr.mxu0 0.0
  %806 = vmatpush1.msra.mxu0 0.0
  %807 = vmatprep.subr.mxu0 0.0
  %808 = vmatpush1.msra.mxu0 0.0
  %809 = vmatprep.mubr.f32.mxu0 0.0
  %810 = vmatmul.mubr.f32.gmra.mrb[0].mxu0 %v743
  %v811 = vpop.f32.mrb[0].mxu0
  %v812 = vadd.f32 0.0, %v811
  %v813 = vpop.f32.mrb[0].mxu0
  %v814 = vadd.f32 0.0, %v813
  %815 = vdwg.mxu0
  %v816 = vadd.f32 %v738, %v812
  %v817 = vadd.f32 %v739, %v814
  %v818 = vxor.u32 %v816, 2147483648
  %v819 = vxor.u32 %v817, 2147483648
  %v820 = vmul.f32 %v818, 1.442695
  %v821 = vpow.pop %v820
  %v822 = vmul.f32 %v819, 1.442695
  %v823 = vpow.pop %v822
  %v824 = vadd.f32 %v821, 1.0
  %v825 = vadd.f32 %v823, 1.0
  %v826 = vrcp.pop %v824
  %v827 = vmul.f32 1.0, %v826
  %v828 = vrcp.pop %v825
  %v829 = vmul.f32 1.0, %v828
  %v830 = vtanh.pop %v817
  %v831 = vmul.f32 %v827, %v726
  %v832 = vmul.f32 %v827, %v830
  %834 = vrot.lane.b32.xlu0 %v832, 64
  %v835 = vpop.permute.xlu0 %834
  %v837 = vadd.f32 %v831, %v835
  %v838 = vtanh.pop %v837
  %v839 = vmul.f32 %v829, %v838
  %s840 = scalar_lea.vmem %s0, 56
  %v841 = vld [vmem:[%s840] sm:$0xff]
  %843 = vset.pattern.permute.xlu0 0
  %844 = vperm.xlu0 %843, %v841
  %v845 = vpop.permute.xlu0 %844
  %v847 = vmul.f32 %v845, %v37
  %v848 = vmul.f32 %v845, %v41
  %v849 = vadd.f32 %v847, %v50
  %v850 = vadd.f32 %v848, %v54
  %852 = vrot.lane.b32.xlu0 %v839, 64
  %v853 = vpop.permute.xlu0 %852
  %v854 = vsel %vm75, %v853, 0
  %856 = vmatprep.subr.mxu0 %v60
  %857 = vmatpush1.msra.mxu0 %v59
  %858 = vmatprep.subr.mxu0 %v62
  %859 = vmatpush1.msra.mxu0 %v61
  %860 = vmatprep.subr.mxu0 %v64
  %861 = vmatpush1.msra.mxu0 %v63
  %862 = vmatprep.subr.mxu0 %v66
  %863 = vmatpush1.msra.mxu0 %v65
  %864 = vmatprep.subr.mxu0 %v68
  %865 = vmatpush1.msra.mxu0 %v67
  %866 = vmatprep.subr.mxu0 %v70
  %867 = vmatpush1.msra.mxu0 %v69
  %868 = vmatprep.subr.mxu0 %v72
  %869 = vmatpush1.msra.mxu0 %v71
  %870 = vmatprep.subr.mxu0 %v74
  %871 = vmatpush1.msra.mxu0 %v73
  %872 = vmatprep.subr.mxu0 0.0
  %873 = vmatpush1.msra.mxu0 0.0
  %874 = vmatprep.subr.mxu0 0.0
  %875 = vmatpush1.msra.mxu0 0.0
  %876 = vmatprep.subr.mxu0 0.0
  %877 = vmatpush1.msra.mxu0 0.0
  %878 = vmatprep.subr.mxu0 0.0
  %879 = vmatpush1.msra.mxu0 0.0
  %880 = vmatprep.subr.mxu0 0.0
  %881 = vmatpush1.msra.mxu0 0.0
  %882 = vmatprep.subr.mxu0 0.0
  %883 = vmatpush1.msra.mxu0 0.0
  %884 = vmatprep.subr.mxu0 0.0
  %885 = vmatpush1.msra.mxu0 0.0
  %886 = vmatprep.subr.mxu0 0.0
  %887 = vmatpush1.msra.mxu0 0.0
  %888 = vmatprep.subr.mxu0 0.0
  %889 = vmatpush1.msra.mxu0 0.0
  %890 = vmatprep.subr.mxu0 0.0
  %891 = vmatpush1.msra.mxu0 0.0
  %892 = vmatprep.subr.mxu0 0.0
  %893 = vmatpush1.msra.mxu0 0.0
  %894 = vmatprep.subr.mxu0 0.0
  %895 = vmatpush1.msra.mxu0 0.0
  %896 = vmatprep.subr.mxu0 0.0
  %897 = vmatpush1.msra.mxu0 0.0
  %898 = vmatprep.subr.mxu0 0.0
  %899 = vmatpush1.msra.mxu0 0.0
  %900 = vmatprep.subr.mxu0 0.0
  %901 = vmatpush1.msra.mxu0 0.0
  %902 = vmatprep.subr.mxu0 0.0
  %903 = vmatpush1.msra.mxu0 0.0
  %904 = vmatprep.subr.mxu0 0.0
  %905 = vmatpush1.msra.mxu0 0.0
  %906 = vmatprep.subr.mxu0 0.0
  %907 = vmatpush1.msra.mxu0 0.0
  %908 = vmatprep.subr.mxu0 0.0
  %909 = vmatpush1.msra.mxu0 0.0
  %910 = vmatprep.subr.mxu0 0.0
  %911 = vmatpush1.msra.mxu0 0.0
  %912 = vmatprep.subr.mxu0 0.0
  %913 = vmatpush1.msra.mxu0 0.0
  %914 = vmatprep.subr.mxu0 0.0
  %915 = vmatpush1.msra.mxu0 0.0
  %916 = vmatprep.subr.mxu0 0.0
  %917 = vmatpush1.msra.mxu0 0.0
  %918 = vmatprep.subr.mxu0 0.0
  %919 = vmatpush1.msra.mxu0 0.0
  %920 = vmatprep.mubr.f32.mxu0 0.0
  %921 = vmatmul.mubr.f32.gmra.mrb[0].mxu0 %v854
  %v922 = vpop.f32.mrb[0].mxu0
  %v923 = vadd.f32 0.0, %v922
  %v924 = vpop.f32.mrb[0].mxu0
  %v925 = vadd.f32 0.0, %v924
  %926 = vdwg.mxu0
  %v927 = vadd.f32 %v849, %v923
  %v928 = vadd.f32 %v850, %v925
  %v929 = vxor.u32 %v927, 2147483648
  %v930 = vxor.u32 %v928, 2147483648
  %v931 = vmul.f32 %v929, 1.442695
  %v932 = vpow.pop %v931
  %v933 = vmul.f32 %v930, 1.442695
  %v934 = vpow.pop %v933
  %v935 = vadd.f32 %v932, 1.0
  %v936 = vadd.f32 %v934, 1.0
  %v937 = vrcp.pop %v935
  %v938 = vmul.f32 1.0, %v937
  %v939 = vrcp.pop %v936
  %v940 = vmul.f32 1.0, %v939
  %v941 = vtanh.pop %v928
  %v942 = vmul.f32 %v938, %v837
  %v943 = vmul.f32 %v938, %v941
  %945 = vrot.lane.b32.xlu0 %v943, 64
  %v946 = vpop.permute.xlu0 %945
  %v948 = vadd.f32 %v942, %v946
  %v949 = vtanh.pop %v948
  %v950 = vmul.f32 %v940, %v949
  %s951 = scalar_lea.vmem %s0, 64
  %v952 = vld [vmem:[%s951] sm:$0xff]
  %954 = vset.pattern.permute.xlu0 0
  %955 = vperm.xlu0 %954, %v952
  %v956 = vpop.permute.xlu0 %955
  %v958 = vmul.f32 %v956, %v37
  %v959 = vmul.f32 %v956, %v41
  %v960 = vadd.f32 %v958, %v50
  %v961 = vadd.f32 %v959, %v54
  %963 = vrot.lane.b32.xlu0 %v950, 64
  %v964 = vpop.permute.xlu0 %963
  %v965 = vsel %vm75, %v964, 0
  %967 = vmatprep.subr.mxu0 %v60
  %968 = vmatpush1.msra.mxu0 %v59
  %969 = vmatprep.subr.mxu0 %v62
  %970 = vmatpush1.msra.mxu0 %v61
  %971 = vmatprep.subr.mxu0 %v64
  %972 = vmatpush1.msra.mxu0 %v63
  %973 = vmatprep.subr.mxu0 %v66
  %974 = vmatpush1.msra.mxu0 %v65
  %975 = vmatprep.subr.mxu0 %v68
  %976 = vmatpush1.msra.mxu0 %v67
  %977 = vmatprep.subr.mxu0 %v70
  %978 = vmatpush1.msra.mxu0 %v69
  %979 = vmatprep.subr.mxu0 %v72
  %980 = vmatpush1.msra.mxu0 %v71
  %981 = vmatprep.subr.mxu0 %v74
  %982 = vmatpush1.msra.mxu0 %v73
  %983 = vmatprep.subr.mxu0 0.0
  %984 = vmatpush1.msra.mxu0 0.0
  %985 = vmatprep.subr.mxu0 0.0
  %986 = vmatpush1.msra.mxu0 0.0
  %987 = vmatprep.subr.mxu0 0.0
  %988 = vmatpush1.msra.mxu0 0.0
  %989 = vmatprep.subr.mxu0 0.0
  %990 = vmatpush1.msra.mxu0 0.0
  %991 = vmatprep.subr.mxu0 0.0
  %992 = vmatpush1.msra.mxu0 0.0
  %993 = vmatprep.subr.mxu0 0.0
  %994 = vmatpush1.msra.mxu0 0.0
  %995 = vmatprep.subr.mxu0 0.0
  %996 = vmatpush1.msra.mxu0 0.0
  %997 = vmatprep.subr.mxu0 0.0
  %998 = vmatpush1.msra.mxu0 0.0
  %999 = vmatprep.subr.mxu0 0.0
  %1000 = vmatpush1.msra.mxu0 0.0
  %1001 = vmatprep.subr.mxu0 0.0
  %1002 = vmatpush1.msra.mxu0 0.0
  %1003 = vmatprep.subr.mxu0 0.0
  %1004 = vmatpush1.msra.mxu0 0.0
  %1005 = vmatprep.subr.mxu0 0.0
  %1006 = vmatpush1.msra.mxu0 0.0
  %1007 = vmatprep.subr.mxu0 0.0
  %1008 = vmatpush1.msra.mxu0 0.0
  %1009 = vmatprep.subr.mxu0 0.0
  %1010 = vmatpush1.msra.mxu0 0.0
  %1011 = vmatprep.subr.mxu0 0.0
  %1012 = vmatpush1.msra.mxu0 0.0
  %1013 = vmatprep.subr.mxu0 0.0
  %1014 = vmatpush1.msra.mxu0 0.0
  %1015 = vmatprep.subr.mxu0 0.0
  %1016 = vmatpush1.msra.mxu0 0.0
  %1017 = vmatprep.subr.mxu0 0.0
  %1018 = vmatpush1.msra.mxu0 0.0
  %1019 = vmatprep.subr.mxu0 0.0
  %1020 = vmatpush1.msra.mxu0 0.0
  %1021 = vmatprep.subr.mxu0 0.0
  %1022 = vmatpush1.msra.mxu0 0.0
  %1023 = vmatprep.subr.mxu0 0.0
  %1024 = vmatpush1.msra.mxu0 0.0
  %1025 = vmatprep.subr.mxu0 0.0
  %1026 = vmatpush1.msra.mxu0 0.0
  %1027 = vmatprep.subr.mxu0 0.0
  %1028 = vmatpush1.msra.mxu0 0.0
  %1029 = vmatprep.subr.mxu0 0.0
  %1030 = vmatpush1.msra.mxu0 0.0
  %1031 = vmatprep.mubr.f32.mxu0 0.0
  %1032 = vmatmul.mubr.f32.gmra.mrb[0].mxu0 %v965
  %v1033 = vpop.f32.mrb[0].mxu0
  %v1034 = vadd.f32 0.0, %v1033
  %v1035 = vpop.f32.mrb[0].mxu0
  %v1036 = vadd.f32 0.0, %v1035
  %1037 = vdwg.mxu0
  %v1038 = vadd.f32 %v960, %v1034
  %v1039 = vadd.f32 %v961, %v1036
  %v1040 = vxor.u32 %v1038, 2147483648
  %v1041 = vxor.u32 %v1039, 2147483648
  %v1042 = vmul.f32 %v1040, 1.442695
  %v1043 = vpow.pop %v1042
  %v1044 = vmul.f32 %v1041, 1.442695
  %v1045 = vpow.pop %v1044
  %v1046 = vadd.f32 %v1043, 1.0
  %v1047 = vadd.f32 %v1045, 1.0
  %v1048 = vrcp.pop %v1046
  %v1049 = vmul.f32 1.0, %v1048
  %v1050 = vrcp.pop %v1047
  %v1051 = vmul.f32 1.0, %v1050
  %v1052 = vtanh.pop %v1039
  %v1053 = vmul.f32 %v1049, %v948
  %v1054 = vmul.f32 %v1049, %v1052
  %1056 = vrot.lane.b32.xlu0 %v1054, 64
  %v1057 = vpop.permute.xlu0 %1056
  %v1059 = vadd.f32 %v1053, %v1057
  %v1060 = vtanh.pop %v1059
  %v1061 = vmul.f32 %v1051, %v1060
  %s1062 = scalar_lea.vmem %s0, 72
  %v1063 = vld [vmem:[%s1062] sm:$0xff]
  %1065 = vset.pattern.permute.xlu0 0
  %1066 = vperm.xlu0 %1065, %v1063
  %v1067 = vpop.permute.xlu0 %1066
  %v1069 = vmul.f32 %v1067, %v37
  %v1070 = vmul.f32 %v1067, %v41
  %v1071 = vadd.f32 %v1069, %v50
  %v1072 = vadd.f32 %v1070, %v54
  %1074 = vrot.lane.b32.xlu0 %v1061, 64
  %v1075 = vpop.permute.xlu0 %1074
  %v1076 = vsel %vm75, %v1075, 0
  %1078 = vmatprep.subr.mxu0 %v60
  %1079 = vmatpush1.msra.mxu0 %v59
  %1080 = vmatprep.subr.mxu0 %v62
  %1081 = vmatpush1.msra.mxu0 %v61
  %1082 = vmatprep.subr.mxu0 %v64
  %1083 = vmatpush1.msra.mxu0 %v63
  %1084 = vmatprep.subr.mxu0 %v66
  %1085 = vmatpush1.msra.mxu0 %v65
  %1086 = vmatprep.subr.mxu0 %v68
  %1087 = vmatpush1.msra.mxu0 %v67
  %1088 = vmatprep.subr.mxu0 %v70
  %1089 = vmatpush1.msra.mxu0 %v69
  %1090 = vmatprep.subr.mxu0 %v72
  %1091 = vmatpush1.msra.mxu0 %v71
  %1092 = vmatprep.subr.mxu0 %v74
  %1093 = vmatpush1.msra.mxu0 %v73
  %1094 = vmatprep.subr.mxu0 0.0
  %1095 = vmatpush1.msra.mxu0 0.0
  %1096 = vmatprep.subr.mxu0 0.0
  %1097 = vmatpush1.msra.mxu0 0.0
  %1098 = vmatprep.subr.mxu0 0.0
  %1099 = vmatpush1.msra.mxu0 0.0
  %1100 = vmatprep.subr.mxu0 0.0
  %1101 = vmatpush1.msra.mxu0 0.0
  %1102 = vmatprep.subr.mxu0 0.0
  %1103 = vmatpush1.msra.mxu0 0.0
  %1104 = vmatprep.subr.mxu0 0.0
  %1105 = vmatpush1.msra.mxu0 0.0
  %1106 = vmatprep.subr.mxu0 0.0
  %1107 = vmatpush1.msra.mxu0 0.0
  %1108 = vmatprep.subr.mxu0 0.0
  %1109 = vmatpush1.msra.mxu0 0.0
  %1110 = vmatprep.subr.mxu0 0.0
  %1111 = vmatpush1.msra.mxu0 0.0
  %1112 = vmatprep.subr.mxu0 0.0
  %1113 = vmatpush1.msra.mxu0 0.0
  %1114 = vmatprep.subr.mxu0 0.0
  %1115 = vmatpush1.msra.mxu0 0.0
  %1116 = vmatprep.subr.mxu0 0.0
  %1117 = vmatpush1.msra.mxu0 0.0
  %1118 = vmatprep.subr.mxu0 0.0
  %1119 = vmatpush1.msra.mxu0 0.0
  %1120 = vmatprep.subr.mxu0 0.0
  %1121 = vmatpush1.msra.mxu0 0.0
  %1122 = vmatprep.subr.mxu0 0.0
  %1123 = vmatpush1.msra.mxu0 0.0
  %1124 = vmatprep.subr.mxu0 0.0
  %1125 = vmatpush1.msra.mxu0 0.0
  %1126 = vmatprep.subr.mxu0 0.0
  %1127 = vmatpush1.msra.mxu0 0.0
  %1128 = vmatprep.subr.mxu0 0.0
  %1129 = vmatpush1.msra.mxu0 0.0
  %1130 = vmatprep.subr.mxu0 0.0
  %1131 = vmatpush1.msra.mxu0 0.0
  %1132 = vmatprep.subr.mxu0 0.0
  %1133 = vmatpush1.msra.mxu0 0.0
  %1134 = vmatprep.subr.mxu0 0.0
  %1135 = vmatpush1.msra.mxu0 0.0
  %1136 = vmatprep.subr.mxu0 0.0
  %1137 = vmatpush1.msra.mxu0 0.0
  %1138 = vmatprep.subr.mxu0 0.0
  %1139 = vmatpush1.msra.mxu0 0.0
  %1140 = vmatprep.subr.mxu0 0.0
  %1141 = vmatpush1.msra.mxu0 0.0
  %1142 = vmatprep.mubr.f32.mxu0 0.0
  %1143 = vmatmul.mubr.f32.gmra.mrb[0].mxu0 %v1076
  %v1144 = vpop.f32.mrb[0].mxu0
  %v1145 = vadd.f32 0.0, %v1144
  %v1146 = vpop.f32.mrb[0].mxu0
  %v1147 = vadd.f32 0.0, %v1146
  %1148 = vdwg.mxu0
  %v1149 = vadd.f32 %v1071, %v1145
  %v1150 = vadd.f32 %v1072, %v1147
  %v1151 = vxor.u32 %v1149, 2147483648
  %v1152 = vxor.u32 %v1150, 2147483648
  %v1153 = vmul.f32 %v1151, 1.442695
  %v1154 = vpow.pop %v1153
  %v1155 = vmul.f32 %v1152, 1.442695
  %v1156 = vpow.pop %v1155
  %v1157 = vadd.f32 %v1154, 1.0
  %v1158 = vadd.f32 %v1156, 1.0
  %v1159 = vrcp.pop %v1157
  %v1160 = vmul.f32 1.0, %v1159
  %v1161 = vrcp.pop %v1158
  %v1162 = vmul.f32 1.0, %v1161
  %v1163 = vtanh.pop %v1150
  %v1164 = vmul.f32 %v1160, %v1059
  %v1165 = vmul.f32 %v1160, %v1163
  %1167 = vrot.lane.b32.xlu0 %v1165, 64
  %v1168 = vpop.permute.xlu0 %1167
  %v1170 = vadd.f32 %v1164, %v1168
  %v1171 = vtanh.pop %v1170
  %v1172 = vmul.f32 %v1162, %v1171
  %s1173 = scalar_lea.vmem %s0, 80
  %v1174 = vld [vmem:[%s1173] sm:$0xff]
  %1176 = vset.pattern.permute.xlu0 0
  %1177 = vperm.xlu0 %1176, %v1174
  %v1178 = vpop.permute.xlu0 %1177
  %v1180 = vmul.f32 %v1178, %v37
  %v1181 = vmul.f32 %v1178, %v41
  %v1182 = vadd.f32 %v1180, %v50
  %v1183 = vadd.f32 %v1181, %v54
  %1185 = vrot.lane.b32.xlu0 %v1172, 64
  %v1186 = vpop.permute.xlu0 %1185
  %v1187 = vsel %vm75, %v1186, 0
  %1189 = vmatprep.subr.mxu0 %v60
  %1190 = vmatpush1.msra.mxu0 %v59
  %1191 = vmatprep.subr.mxu0 %v62
  %1192 = vmatpush1.msra.mxu0 %v61
  %1193 = vmatprep.subr.mxu0 %v64
  %1194 = vmatpush1.msra.mxu0 %v63
  %1195 = vmatprep.subr.mxu0 %v66
  %1196 = vmatpush1.msra.mxu0 %v65
  %1197 = vmatprep.subr.mxu0 %v68
  %1198 = vmatpush1.msra.mxu0 %v67
  %1199 = vmatprep.subr.mxu0 %v70
  %1200 = vmatpush1.msra.mxu0 %v69
  %1201 = vmatprep.subr.mxu0 %v72
  %1202 = vmatpush1.msra.mxu0 %v71
  %1203 = vmatprep.subr.mxu0 %v74
  %1204 = vmatpush1.msra.mxu0 %v73
  %1205 = vmatprep.subr.mxu0 0.0
  %1206 = vmatpush1.msra.mxu0 0.0
  %1207 = vmatprep.subr.mxu0 0.0
  %1208 = vmatpush1.msra.mxu0 0.0
  %1209 = vmatprep.subr.mxu0 0.0
  %1210 = vmatpush1.msra.mxu0 0.0
  %1211 = vmatprep.subr.mxu0 0.0
  %1212 = vmatpush1.msra.mxu0 0.0
  %1213 = vmatprep.subr.mxu0 0.0
  %1214 = vmatpush1.msra.mxu0 0.0
  %1215 = vmatprep.subr.mxu0 0.0
  %1216 = vmatpush1.msra.mxu0 0.0
  %1217 = vmatprep.subr.mxu0 0.0
  %1218 = vmatpush1.msra.mxu0 0.0
  %1219 = vmatprep.subr.mxu0 0.0
  %1220 = vmatpush1.msra.mxu0 0.0
  %1221 = vmatprep.subr.mxu0 0.0
  %1222 = vmatpush1.msra.mxu0 0.0
  %1223 = vmatprep.subr.mxu0 0.0
  %1224 = vmatpush1.msra.mxu0 0.0
  %1225 = vmatprep.subr.mxu0 0.0
  %1226 = vmatpush1.msra.mxu0 0.0
  %1227 = vmatprep.subr.mxu0 0.0
  %1228 = vmatpush1.msra.mxu0 0.0
  %1229 = vmatprep.subr.mxu0 0.0
  %1230 = vmatpush1.msra.mxu0 0.0
  %1231 = vmatprep.subr.mxu0 0.0
  %1232 = vmatpush1.msra.mxu0 0.0
  %1233 = vmatprep.subr.mxu0 0.0
  %1234 = vmatpush1.msra.mxu0 0.0
  %1235 = vmatprep.subr.mxu0 0.0
  %1236 = vmatpush1.msra.mxu0 0.0
  %1237 = vmatprep.subr.mxu0 0.0
  %1238 = vmatpush1.msra.mxu0 0.0
  %1239 = vmatprep.subr.mxu0 0.0
  %1240 = vmatpush1.msra.mxu0 0.0
  %1241 = vmatprep.subr.mxu0 0.0
  %1242 = vmatpush1.msra.mxu0 0.0
  %1243 = vmatprep.subr.mxu0 0.0
  %1244 = vmatpush1.msra.mxu0 0.0
  %1245 = vmatprep.subr.mxu0 0.0
  %1246 = vmatpush1.msra.mxu0 0.0
  %1247 = vmatprep.subr.mxu0 0.0
  %1248 = vmatpush1.msra.mxu0 0.0
  %1249 = vmatprep.subr.mxu0 0.0
  %1250 = vmatpush1.msra.mxu0 0.0
  %1251 = vmatprep.subr.mxu0 0.0
  %1252 = vmatpush1.msra.mxu0 0.0
  %1253 = vmatprep.mubr.f32.mxu0 0.0
  %1254 = vmatmul.mubr.f32.gmra.mrb[0].mxu0 %v1187
  %v1255 = vpop.f32.mrb[0].mxu0
  %v1256 = vadd.f32 0.0, %v1255
  %v1257 = vpop.f32.mrb[0].mxu0
  %v1258 = vadd.f32 0.0, %v1257
  %1259 = vdwg.mxu0
  %v1260 = vadd.f32 %v1182, %v1256
  %v1261 = vadd.f32 %v1183, %v1258
  %v1262 = vxor.u32 %v1260, 2147483648
  %v1263 = vxor.u32 %v1261, 2147483648
  %v1264 = vmul.f32 %v1262, 1.442695
  %v1265 = vpow.pop %v1264
  %v1266 = vmul.f32 %v1263, 1.442695
  %v1267 = vpow.pop %v1266
  %v1268 = vadd.f32 %v1265, 1.0
  %v1269 = vadd.f32 %v1267, 1.0
  %v1270 = vrcp.pop %v1268
  %v1271 = vmul.f32 1.0, %v1270
  %v1272 = vrcp.pop %v1269
  %v1273 = vmul.f32 1.0, %v1272
  %v1274 = vtanh.pop %v1261
  %v1275 = vmul.f32 %v1271, %v1170
  %v1276 = vmul.f32 %v1271, %v1274
  %1278 = vrot.lane.b32.xlu0 %v1276, 64
  %v1279 = vpop.permute.xlu0 %1278
  %v1281 = vadd.f32 %v1275, %v1279
  %v1282 = vtanh.pop %v1281
  %v1283 = vmul.f32 %v1273, %v1282
  %s1284 = scalar_lea.vmem %s0, 88
  %v1285 = vld [vmem:[%s1284] sm:$0xff]
  %1287 = vset.pattern.permute.xlu0 0
  %1288 = vperm.xlu0 %1287, %v1285
  %v1289 = vpop.permute.xlu0 %1288
  %v1291 = vmul.f32 %v1289, %v37
  %v1292 = vmul.f32 %v1289, %v41
  %v1293 = vadd.f32 %v1291, %v50
  %v1294 = vadd.f32 %v1292, %v54
  %1296 = vrot.lane.b32.xlu0 %v1283, 64
  %v1297 = vpop.permute.xlu0 %1296
  %v1298 = vsel %vm75, %v1297, 0
  %1300 = vmatprep.subr.mxu0 %v60
  %1301 = vmatpush1.msra.mxu0 %v59
  %1302 = vmatprep.subr.mxu0 %v62
  %1303 = vmatpush1.msra.mxu0 %v61
  %1304 = vmatprep.subr.mxu0 %v64
  %1305 = vmatpush1.msra.mxu0 %v63
  %1306 = vmatprep.subr.mxu0 %v66
  %1307 = vmatpush1.msra.mxu0 %v65
  %1308 = vmatprep.subr.mxu0 %v68
  %1309 = vmatpush1.msra.mxu0 %v67
  %1310 = vmatprep.subr.mxu0 %v70
  %1311 = vmatpush1.msra.mxu0 %v69
  %1312 = vmatprep.subr.mxu0 %v72
  %1313 = vmatpush1.msra.mxu0 %v71
  %1314 = vmatprep.subr.mxu0 %v74
  %1315 = vmatpush1.msra.mxu0 %v73
  %1316 = vmatprep.subr.mxu0 0.0
  %1317 = vmatpush1.msra.mxu0 0.0
  %1318 = vmatprep.subr.mxu0 0.0
  %1319 = vmatpush1.msra.mxu0 0.0
  %1320 = vmatprep.subr.mxu0 0.0
  %1321 = vmatpush1.msra.mxu0 0.0
  %1322 = vmatprep.subr.mxu0 0.0
  %1323 = vmatpush1.msra.mxu0 0.0
  %1324 = vmatprep.subr.mxu0 0.0
  %1325 = vmatpush1.msra.mxu0 0.0
  %1326 = vmatprep.subr.mxu0 0.0
  %1327 = vmatpush1.msra.mxu0 0.0
  %1328 = vmatprep.subr.mxu0 0.0
  %1329 = vmatpush1.msra.mxu0 0.0
  %1330 = vmatprep.subr.mxu0 0.0
  %1331 = vmatpush1.msra.mxu0 0.0
  %1332 = vmatprep.subr.mxu0 0.0
  %1333 = vmatpush1.msra.mxu0 0.0
  %1334 = vmatprep.subr.mxu0 0.0
  %1335 = vmatpush1.msra.mxu0 0.0
  %1336 = vmatprep.subr.mxu0 0.0
  %1337 = vmatpush1.msra.mxu0 0.0
  %1338 = vmatprep.subr.mxu0 0.0
  %1339 = vmatpush1.msra.mxu0 0.0
  %1340 = vmatprep.subr.mxu0 0.0
  %1341 = vmatpush1.msra.mxu0 0.0
  %1342 = vmatprep.subr.mxu0 0.0
  %1343 = vmatpush1.msra.mxu0 0.0
  %1344 = vmatprep.subr.mxu0 0.0
  %1345 = vmatpush1.msra.mxu0 0.0
  %1346 = vmatprep.subr.mxu0 0.0
  %1347 = vmatpush1.msra.mxu0 0.0
  %1348 = vmatprep.subr.mxu0 0.0
  %1349 = vmatpush1.msra.mxu0 0.0
  %1350 = vmatprep.subr.mxu0 0.0
  %1351 = vmatpush1.msra.mxu0 0.0
  %1352 = vmatprep.subr.mxu0 0.0
  %1353 = vmatpush1.msra.mxu0 0.0
  %1354 = vmatprep.subr.mxu0 0.0
  %1355 = vmatpush1.msra.mxu0 0.0
  %1356 = vmatprep.subr.mxu0 0.0
  %1357 = vmatpush1.msra.mxu0 0.0
  %1358 = vmatprep.subr.mxu0 0.0
  %1359 = vmatpush1.msra.mxu0 0.0
  %1360 = vmatprep.subr.mxu0 0.0
  %1361 = vmatpush1.msra.mxu0 0.0
  %1362 = vmatprep.subr.mxu0 0.0
  %1363 = vmatpush1.msra.mxu0 0.0
  %1364 = vmatprep.mubr.f32.mxu0 0.0
  %1365 = vmatmul.mubr.f32.gmra.mrb[0].mxu0 %v1298
  %v1366 = vpop.f32.mrb[0].mxu0
  %v1367 = vadd.f32 0.0, %v1366
  %v1368 = vpop.f32.mrb[0].mxu0
  %v1369 = vadd.f32 0.0, %v1368
  %1370 = vdwg.mxu0
  %v1371 = vadd.f32 %v1293, %v1367
  %v1372 = vadd.f32 %v1294, %v1369
  %v1373 = vxor.u32 %v1371, 2147483648
  %v1374 = vxor.u32 %v1372, 2147483648
  %v1375 = vmul.f32 %v1373, 1.442695
  %v1376 = vpow.pop %v1375
  %v1377 = vmul.f32 %v1374, 1.442695
  %v1378 = vpow.pop %v1377
  %v1379 = vadd.f32 %v1376, 1.0
  %v1380 = vadd.f32 %v1378, 1.0
  %v1381 = vrcp.pop %v1379
  %v1382 = vmul.f32 1.0, %v1381
  %v1383 = vrcp.pop %v1380
  %v1384 = vmul.f32 1.0, %v1383
  %v1385 = vtanh.pop %v1372
  %v1386 = vmul.f32 %v1382, %v1281
  %v1387 = vmul.f32 %v1382, %v1385
  %1389 = vrot.lane.b32.xlu0 %v1387, 64
  %v1390 = vpop.permute.xlu0 %1389
  %v1392 = vadd.f32 %v1386, %v1390
  %v1393 = vtanh.pop %v1392
  %v1394 = vmul.f32 %v1384, %v1393
  %v1395 = vld [vmem:[%s4] sm:$0x1]
  %v1397 = vlaneseq
  %v1398 = vshrl.u32 %v1397, 7
  %v1399 = vsub.s32 0, %v1398
  %v1400 = vrot.slane %v1395, %v1399
  %1401 = vrot.lane.b32.xlu0 %v1400, 64
  %v1402 = vpop.permute.xlu0 %1401
  %v1404 = vmul.f32 %v1394, %v1402
  %1406 = vrot.lane.b32.xlu0 %v1404, 64
  %v1407 = vpop.permute.xlu0 %1406
  %v1409 = vsel %vm75, %v1407, 0.0
  %1410 = vadd.xlane.f32.xlu0 %v1409
  %v1411 = vpop.xlane.xlu0 %1410
  %v1412 = vld [vmem:[#allocation2] sm:$0x1]
  %v1414 = vlaneseq
  %v1415 = vshrl.u32 %v1414, 7
  %v1416 = vsub.s32 0, %v1415
  %v1417 = vrot.slane %v1412, %v1416
  %v1419 = vadd.f32 %v1411, %v1417
  %vm1420 = vcmask 7168
  %1421 = vst.msk [vmem:[%s6] sm:$0xff] %vm1420, %v1419
  // Predicated region
  $region26: #{lstm_model_forward.1} parent=0 // pred_check
    _
  $region27: #{lstm_model_forward.1} parent=0 // pred_check_branch
    %1423 = sbr.rel (0) target = $region29
  $region28: #{lstm_model_forward.1} parent=0 // pred_region
    _
  $region29: #{lstm_model_forward.1} parent=0 // pred_fallthru
    _
  // Predicated region
  $region30: #{lstm_model_forward.1} parent=0 // pred_check
    _
  $region31: #{lstm_model_forward.1} parent=0 // pred_check_branch
    %1425 = sbr.rel (0) target = $region33
  $region32: #{lstm_model_forward.1} parent=0 // pred_region
    _
  $region33: #{lstm_model_forward.1} parent=0 // pred_fallthru
    _

</llo_original>
